<compile_context>
chip_gen: v7x
topology: tpu7x:2x2x1
jax: 0.10.0
libtpu: 0.0.40
codegen_flags: <defaults>
</compile_context>

<pallas_src>
import functools

import jax
import jax.numpy as jnp
from jax.experimental import pallas as pl
from jax.experimental.pallas import tpu as pltpu


def _round_up(x, m):
    return (x + m - 1) // m * m


def _conv_relu_kernel(x_ref, w_ref, o_ref, patch_ref, *,
                      tile_h, w_out_t, kh_size, kw_size, c_in):
    """One row-tile grid step.

    x_ref:     (tile_h + KH - 1, W_out_t + KW - 1, Cin)   halo'd padded input
    w_ref:     (K, C_out)            im2col weight matrix, K = KH*KW*Cin
    o_ref:     (tile_h * W_out_t, C_out)
    patch_ref: (tile_h, W_out_t, K)  VMEM im2col scratch
    """
    # im2col build: each (kh, kw) tap is a direct band copy into its Cin-wide
    # lane window of the contraction dim (no per-tap reshape / relayout).
    for kh in range(kh_size):
        for kw in range(kw_size):
            tap = kh * kw_size + kw
            patch_ref[:, :, tap * c_in:(tap + 1) * c_in] = (
                x_ref[kh:kh + tile_h, kw:kw + w_out_t, :])

    k = kh_size * kw_size * c_in
    # Free view: W_out_t is a multiple of 8, so merging (tile_h, W_out_t) does
    # not cross (8,128) tile boundaries.
    patch = patch_ref[...].reshape(tile_h * w_out_t, k)
    acc = jnp.dot(patch, w_ref[...], preferred_element_type=jnp.float32)
    o_ref[...] = jnp.maximum(acc, 0.0).astype(o_ref.dtype)


@functools.partial(jax.jit,
                   static_argnames=("stride", "pad", "dilation", "tile_h",
                                    "compute_dtype"))
def conv_relu(x_nchw, weight_oihw, *, stride=1, pad=1, dilation=1,
              tile_h=None, compute_dtype=jnp.bfloat16):
    """ConvReLU forward. x_nchw: (B, Cin, H, W); weight_oihw: (Cout, Cin, KH, KW).

    compute_dtype: matmul operand dtype (bf16 default; accumulation is always
    f32 and the result keeps x's dtype).  Use jnp.float32 for exact f32 math.
    """
    assert stride == 1 and dilation == 1, "specialized to stride=1, dilation=1"
    # TODO(synk): general stride/dilation paths not implemented (module defaults).
    B, C_in, H, W = x_nchw.shape
    C_out, C_in_w, KH, KW = weight_oihw.shape
    assert C_in == C_in_w

    H_out = H + 2 * pad - KH + 1
    W_out = W + 2 * pad - KW + 1
    assert H_out >= 1 and W_out >= 1, "padding inconsistent with kernel size"

    out_dtype = x_nchw.dtype
    cdtype = (jnp.dtype(compute_dtype) if compute_dtype is not None
              else jnp.dtype(out_dtype))
    cbytes = jnp.dtype(cdtype).itemsize
    obytes = jnp.dtype(out_dtype).itemsize

    # Output width rounded to a sublane multiple; extra columns are computed on
    # zero padding and sliced off by the wrapper.
    W_out_t = _round_up(W_out, 8)
    Wp_t = W_out_t + KW - 1
    K = KH * KW * C_in

    # ---- per-generation VMEM budget (limit is per TensorCore) --------------
    try:
        vmem_cap = int(pltpu.get_tpu_info().vmem_capacity_bytes)
    except Exception:
        vmem_cap = 64 * 1024 * 1024          # conservative (v7x has 64 MiB/TC)
    vmem_limit = min((vmem_cap * 3) // 4, 96 * 1024 * 1024)
    tile_budget = (vmem_limit * 3) // 4

    def footprint(th):
        lane = lambda n: _round_up(n, 128)
        sub = lambda n: _round_up(n, 8)
        thp = th + KH - 1
        m = th * W_out_t
        in_b = 2 * thp * sub(Wp_t) * lane(C_in) * cbytes     # double-buffered in
        w_b = 2 * sub(K) * lane(C_out) * cbytes              # resident weights
        patch_b = th * sub(W_out_t) * lane(K) * cbytes       # im2col scratch
        out_b = 2 * m * lane(C_out) * obytes                 # double-buffered out
        acc_b = m * lane(C_out) * 4                          # f32 matmul result
        return in_b + w_b + patch_b + out_b + acc_b

    # ---- row-tile size: target M = tile_h * W_out_t ~ 1024 output rows -----
    if tile_h is None:
        tile_h = _round_up(max(1, -(-1024 // W_out_t)), 8)
    tile_h = min(_round_up(tile_h, 8), _round_up(H_out, 8))
    if B == 1:  # keep >= 2 grid steps so both v7x TensorCores get work
        tile_h = min(tile_h, max(8, _round_up(-(-H_out // 2), 8)))
    while tile_h > 8 and footprint(tile_h) > tile_budget:
        tile_h -= 8
    tile_h = max(tile_h, 8)

    NT = -(-H_out // tile_h)          # number of row tiles
    H_eff = NT * tile_h               # H_out rounded up to the tile
    tile_hp = tile_h + KH - 1         # input rows per tile (with halo)
    M = tile_h * W_out_t              # flattened output rows per grid step

    # ---- layout plumbing (XLA glue) -----------------------------------------
    x_nhwc = jnp.transpose(x_nchw, (0, 2, 3, 1)).astype(cdtype)
    x_pad = jnp.pad(x_nhwc, ((0, 0),
                             (pad, pad + H_eff - H_out),
                             (pad, pad + W_out_t - W_out),
                             (0, 0)))
    row_idx = jnp.arange(NT)[:, None] * tile_h + jnp.arange(tile_hp)[None, :]
    x_tiles = x_pad[:, row_idx].reshape(B * NT, tile_hp, Wp_t, C_in)

    # Weights: (Cout, Cin, KH, KW) -> (KH, KW, Cin, Cout) -> (K, Cout).
    w_mat = jnp.transpose(weight_oihw, (2, 3, 1, 0)).reshape(K, C_out).astype(cdtype)

    kernel = functools.partial(_conv_relu_kernel, tile_h=tile_h, w_out_t=W_out_t,
                               kh_size=KH, kw_size=KW, c_in=C_in)

    out_flat = pl.pallas_call(
        kernel,
        out_shape=jax.ShapeDtypeStruct((B * NT, M, C_out), out_dtype),
        grid_spec=pltpu.PrefetchScalarGridSpec(
            num_scalar_prefetch=0,
            grid=(B * NT,),
            in_specs=[
                # halo'd input tile (leading tile axis squeezed from the view)
                pl.BlockSpec((None, tile_hp, Wp_t, C_in),
                             lambda s: (s, 0, 0, 0)),
                # im2col weight matrix, resident in VMEM across the grid
                pl.BlockSpec((K, C_out), lambda s: (0, 0)),
            ],
            out_specs=pl.BlockSpec((None, M, C_out), lambda s: (s, 0, 0)),
            scratch_shapes=[pltpu.VMEM((tile_h, W_out_t, K), cdtype)],
        ),
        compiler_params=pltpu.CompilerParams(
            dimension_semantics=("parallel",),
            vmem_limit_bytes=int(vmem_limit)),
    )(x_tiles, w_mat)

    # (B*NT, M, Cout) -> (B, H_eff, W_out_t, Cout) -> NCHW, dropping padding.
    out = out_flat.reshape(B, H_eff, W_out_t, C_out)[:, :H_out, :W_out, :]
    return jnp.transpose(out, (0, 3, 1, 2))


if __name__ == "__main__":
    key = jax.random.PRNGKey(0)
    k_x, k_w = jax.random.split(key)

    B, C_in, C_out, H, W = 2, 4, 8, 16, 16
    KH = KW = 3

    x = jax.random.normal(k_x, (B, C_in, H, W), dtype=jnp.float32)
    # Deterministic Conv2d weight init (kaiming-uniform-like scale, no bias).
    fan_in = C_in * KH * KW
    bound = (1.0 / fan_in) ** 0.5
    weight = jax.random.uniform(k_w, (C_out, C_in, KH, KW),
                                dtype=jnp.float32, minval=-bound, maxval=bound)

    # Reference: XLA conv + relu (same semantics as nn.Conv2d(bias=False) + relu).
    ref = jax.lax.conv_general_dilated(
        x, weight, window_strides=(1, 1), padding=((1, 1), (1, 1)),
        dimension_numbers=("NCHW", "OIHW", "NCHW"))
    ref = jnp.maximum(ref, 0.0)

    # Exact f32-operand path (matches the PyTorch module's numerics).
    out_f32 = conv_relu(x, weight, stride=1, pad=1, dilation=1,
                        compute_dtype=jnp.float32)
    out_f32 = jax.block_until_ready(out_f32)
    assert out_f32.shape == (B, C_out, H, W)
    assert jnp.allclose(out_f32, ref, atol=1e-4, rtol=1e-4)

    # Default path: bf16 operands, f32 accumulation (looser tolerance).
    out_bf16 = conv_relu(x, weight, stride=1, pad=1, dilation=1)
    out_bf16 = jax.block_until_ready(out_bf16)
    assert out_bf16.shape == (B, C_out, H, W)
    assert jnp.allclose(out_bf16, ref, atol=1e-1, rtol=1e-1)

    print("KERNEL_OK")
</pallas_src>

<mosaic_0001>
module attributes {stable_mosaic.version = 11 : i64} {
  func.func @_conv_relu_kernel(%arg0: i32, %arg1: memref<1x18x18x4xf32, #tpu.memory_space<vmem>>, %arg2: memref<36x8xf32, #tpu.memory_space<vmem>>, %arg3: memref<1x256x8xf32, #tpu.memory_space<vmem>>, %arg4: memref<16x16x36xf32, #tpu.memory_space<vmem>>) attributes {dimension_semantics = [#tpu.dimension_semantics<parallel>], iteration_bounds = array<i64: 2>, scalar_prefetch = 0 : i64, scratch_operands = 1 : i64, tpu.core_type = #tpu.core_type<tc>, window_params = [{transform_indices = @transform_0, window_bounds = array<i64: 1, 18, 18, 4>}, {pipeline_mode = #tpu.pipeline_mode<synchronous>, transform_indices = @transform_1, window_bounds = array<i64: 36, 8>}, {transform_indices = @transform_2, window_bounds = array<i64: 1, 256, 8>}]} {
    %c0 = arith.constant 0 : index
    %c0_0 = arith.constant 0 : index
    %c0_1 = arith.constant 0 : index
    %c0_2 = arith.constant 0 : index
    %0 = vector.load %arg1[%c0, %c0_0, %c0_1, %c0_2] : memref<1x18x18x4xf32, #tpu.memory_space<vmem>>, vector<1x16x16x4xf32>
    %1 = vector.shape_cast %0 : vector<1x16x16x4xf32> to vector<16x16x4xf32>
    %c0_3 = arith.constant 0 : index
    %c0_4 = arith.constant 0 : index
    %c0_5 = arith.constant 0 : index
    %2 = vector.load %arg4[%c0_3, %c0_4, %c0_5] : memref<16x16x36xf32, #tpu.memory_space<vmem>>, vector<16x16x4xf32>
    tpu.vector_store %arg4[%c0_3, %c0_4, %c0_5], %1 {strides = array<i32>} : memref<16x16x36xf32, #tpu.memory_space<vmem>>, vector<16x16x4xf32>,
    %c0_6 = arith.constant 0 : index
    %c0_7 = arith.constant 0 : index
    %c1 = arith.constant 1 : index
    %c0_8 = arith.constant 0 : index
    %3 = vector.load %arg1[%c0_6, %c0_7, %c1, %c0_8] : memref<1x18x18x4xf32, #tpu.memory_space<vmem>>, vector<1x16x16x4xf32>
    %4 = vector.shape_cast %3 : vector<1x16x16x4xf32> to vector<16x16x4xf32>
    %c0_9 = arith.constant 0 : index
    %c0_10 = arith.constant 0 : index
    %c4 = arith.constant 4 : index
    %5 = vector.load %arg4[%c0_9, %c0_10, %c4] : memref<16x16x36xf32, #tpu.memory_space<vmem>>, vector<16x16x4xf32>
    tpu.vector_store %arg4[%c0_9, %c0_10, %c4], %4 {strides = array<i32>} : memref<16x16x36xf32, #tpu.memory_space<vmem>>, vector<16x16x4xf32>,
    %c0_11 = arith.constant 0 : index
    %c0_12 = arith.constant 0 : index
    %c2 = arith.constant 2 : index
    %c0_13 = arith.constant 0 : index
    %6 = vector.load %arg1[%c0_11, %c0_12, %c2, %c0_13] : memref<1x18x18x4xf32, #tpu.memory_space<vmem>>, vector<1x16x16x4xf32>
    %7 = vector.shape_cast %6 : vector<1x16x16x4xf32> to vector<16x16x4xf32>
    %c0_14 = arith.constant 0 : index
    %c0_15 = arith.constant 0 : index
    %c8 = arith.constant 8 : index
    %8 = vector.load %arg4[%c0_14, %c0_15, %c8] : memref<16x16x36xf32, #tpu.memory_space<vmem>>, vector<16x16x4xf32>
    tpu.vector_store %arg4[%c0_14, %c0_15, %c8], %7 {strides = array<i32>} : memref<16x16x36xf32, #tpu.memory_space<vmem>>, vector<16x16x4xf32>,
    %c0_16 = arith.constant 0 : index
    %c1_17 = arith.constant 1 : index
    %c0_18 = arith.constant 0 : index
    %c0_19 = arith.constant 0 : index
    %9 = vector.load %arg1[%c0_16, %c1_17, %c0_18, %c0_19] : memref<1x18x18x4xf32, #tpu.memory_space<vmem>>, vector<1x16x16x4xf32>
    %10 = vector.shape_cast %9 : vector<1x16x16x4xf32> to vector<16x16x4xf32>
    %c0_20 = arith.constant 0 : index
    %c0_21 = arith.constant 0 : index
    %c12 = arith.constant 12 : index
    %11 = vector.load %arg4[%c0_20, %c0_21, %c12] : memref<16x16x36xf32, #tpu.memory_space<vmem>>, vector<16x16x4xf32>
    tpu.vector_store %arg4[%c0_20, %c0_21, %c12], %10 {strides = array<i32>} : memref<16x16x36xf32, #tpu.memory_space<vmem>>, vector<16x16x4xf32>,
    %c0_22 = arith.constant 0 : index
    %c1_23 = arith.constant 1 : index
    %c1_24 = arith.constant 1 : index
    %c0_25 = arith.constant 0 : index
    %12 = vector.load %arg1[%c0_22, %c1_23, %c1_24, %c0_25] : memref<1x18x18x4xf32, #tpu.memory_space<vmem>>, vector<1x16x16x4xf32>
    %13 = vector.shape_cast %12 : vector<1x16x16x4xf32> to vector<16x16x4xf32>
    %c0_26 = arith.constant 0 : index
    %c0_27 = arith.constant 0 : index
    %c16 = arith.constant 16 : index
    %14 = vector.load %arg4[%c0_26, %c0_27, %c16] : memref<16x16x36xf32, #tpu.memory_space<vmem>>, vector<16x16x4xf32>
    tpu.vector_store %arg4[%c0_26, %c0_27, %c16], %13 {strides = array<i32>} : memref<16x16x36xf32, #tpu.memory_space<vmem>>, vector<16x16x4xf32>,
    %c0_28 = arith.constant 0 : index
    %c1_29 = arith.constant 1 : index
    %c2_30 = arith.constant 2 : index
    %c0_31 = arith.constant 0 : index
    %15 = vector.load %arg1[%c0_28, %c1_29, %c2_30, %c0_31] : memref<1x18x18x4xf32, #tpu.memory_space<vmem>>, vector<1x16x16x4xf32>
    %16 = vector.shape_cast %15 : vector<1x16x16x4xf32> to vector<16x16x4xf32>
    %c0_32 = arith.constant 0 : index
    %c0_33 = arith.constant 0 : index
    %c20 = arith.constant 20 : index
    %17 = vector.load %arg4[%c0_32, %c0_33, %c20] : memref<16x16x36xf32, #tpu.memory_space<vmem>>, vector<16x16x4xf32>
    tpu.vector_store %arg4[%c0_32, %c0_33, %c20], %16 {strides = array<i32>} : memref<16x16x36xf32, #tpu.memory_space<vmem>>, vector<16x16x4xf32>,
    %c0_34 = arith.constant 0 : index
    %c2_35 = arith.constant 2 : index
    %c0_36 = arith.constant 0 : index
    %c0_37 = arith.constant 0 : index
    %18 = vector.load %arg1[%c0_34, %c2_35, %c0_36, %c0_37] : memref<1x18x18x4xf32, #tpu.memory_space<vmem>>, vector<1x16x16x4xf32>
    %19 = vector.shape_cast %18 : vector<1x16x16x4xf32> to vector<16x16x4xf32>
    %c0_38 = arith.constant 0 : index
    %c0_39 = arith.constant 0 : index
    %c24 = arith.constant 24 : index
    %20 = vector.load %arg4[%c0_38, %c0_39, %c24] : memref<16x16x36xf32, #tpu.memory_space<vmem>>, vector<16x16x4xf32>
    tpu.vector_store %arg4[%c0_38, %c0_39, %c24], %19 {strides = array<i32>} : memref<16x16x36xf32, #tpu.memory_space<vmem>>, vector<16x16x4xf32>,
    %c0_40 = arith.constant 0 : index
    %c2_41 = arith.constant 2 : index
    %c1_42 = arith.constant 1 : index
    %c0_43 = arith.constant 0 : index
    %21 = vector.load %arg1[%c0_40, %c2_41, %c1_42, %c0_43] : memref<1x18x18x4xf32, #tpu.memory_space<vmem>>, vector<1x16x16x4xf32>
    %22 = vector.shape_cast %21 : vector<1x16x16x4xf32> to vector<16x16x4xf32>
    %c0_44 = arith.constant 0 : index
    %c0_45 = arith.constant 0 : index
    %c28 = arith.constant 28 : index
    %23 = vector.load %arg4[%c0_44, %c0_45, %c28] : memref<16x16x36xf32, #tpu.memory_space<vmem>>, vector<16x16x4xf32>
    tpu.vector_store %arg4[%c0_44, %c0_45, %c28], %22 {strides = array<i32>} : memref<16x16x36xf32, #tpu.memory_space<vmem>>, vector<16x16x4xf32>,
    %c0_46 = arith.constant 0 : index
    %c2_47 = arith.constant 2 : index
    %c2_48 = arith.constant 2 : index
    %c0_49 = arith.constant 0 : index
    %24 = vector.load %arg1[%c0_46, %c2_47, %c2_48, %c0_49] : memref<1x18x18x4xf32, #tpu.memory_space<vmem>>, vector<1x16x16x4xf32>
    %25 = vector.shape_cast %24 : vector<1x16x16x4xf32> to vector<16x16x4xf32>
    %c0_50 = arith.constant 0 : index
    %c0_51 = arith.constant 0 : index
    %c32 = arith.constant 32 : index
    %26 = vector.load %arg4[%c0_50, %c0_51, %c32] : memref<16x16x36xf32, #tpu.memory_space<vmem>>, vector<16x16x4xf32>
    tpu.vector_store %arg4[%c0_50, %c0_51, %c32], %25 {strides = array<i32>} : memref<16x16x36xf32, #tpu.memory_space<vmem>>, vector<16x16x4xf32>,
    %c0_52 = arith.constant 0 : index
    %c0_53 = arith.constant 0 : index
    %c0_54 = arith.constant 0 : index
    %27 = vector.load %arg4[%c0_52, %c0_53, %c0_54] : memref<16x16x36xf32, #tpu.memory_space<vmem>>, vector<16x16x36xf32>
    %28 = vector.shape_cast %27 : vector<16x16x36xf32> to vector<256x36xf32>
    %c0_55 = arith.constant 0 : index
    %c0_56 = arith.constant 0 : index
    %29 = vector.load %arg2[%c0_55, %c0_56] : memref<36x8xf32, #tpu.memory_space<vmem>>, vector<36x8xf32>
    %cst = arith.constant dense<0.000000e+00> : vector<256x8xf32>
    %30 = tpu.matmul %28, %29, %cst {dimension_numbers = #tpu.dot_dimension_numbers<[1], [0], [0], [1], [0, 0, 1, 1], [], []>} : vector<256x36xf32>, vector<36x8xf32>, vector<256x8xf32> -> vector<256x8xf32>
    %cst_57 = arith.constant 0.000000e+00 : f32
    %31 = vector.broadcast %cst_57 : f32 to vector<256x8xf32>
    %32 = arith.maximumf %30, %31 : vector<256x8xf32>
    %c0_58 = arith.constant 0 : index
    %c0_59 = arith.constant 0 : index
    %c0_60 = arith.constant 0 : index
    %33 = vector.load %arg3[%c0_58, %c0_59, %c0_60] : memref<1x256x8xf32, #tpu.memory_space<vmem>>, vector<1x256x8xf32>
    %34 = vector.shape_cast %33 : vector<1x256x8xf32> to vector<256x8xf32>
    %35 = vector.shape_cast %32 : vector<256x8xf32> to vector<1x256x8xf32>
    tpu.vector_store %arg3[%c0_58, %c0_59, %c0_60], %35 {strides = array<i32>} : memref<1x256x8xf32, #tpu.memory_space<vmem>>, vector<1x256x8xf32>,
    return
  }
  func.func @transform_0(%arg0: i32) -> (i32, i32, i32, i32) {
    %c0_i32 = arith.constant 0 : i32
    %c0_i32_0 = arith.constant 0 : i32
    %c0_i32_1 = arith.constant 0 : i32
    %c0_i32_2 = arith.constant 0 : i32
    return %arg0, %c0_i32, %c0_i32_0, %c0_i32_1 : i32, i32, i32, i32
  }
  func.func @transform_1(%arg0: i32) -> (i32, i32) {
    %c0_i32 = arith.constant 0 : i32
    %c0_i32_0 = arith.constant 0 : i32
    %c0_i32_1 = arith.constant 0 : i32
    return %c0_i32, %c0_i32_0 : i32, i32
  }
  func.func @transform_2(%arg0: i32) -> (i32, i32, i32) {
    %c0_i32 = arith.constant 0 : i32
    %c0_i32_0 = arith.constant 0 : i32
    %c0_i32_1 = arith.constant 0 : i32
    return %arg0, %c0_i32, %c0_i32_0 : i32, i32, i32
  }
}

</mosaic_0001>

<llo_original>
// kernel: conv_relu.1
$region0: #{conv_relu.1}
  #allocation0 [shape = 'u32[]', space=smem, size = 0x4, offset = 0x4, fixed_abs, tag = 'smem constant byte address 0x4 - core index']
  #allocation1 [shape = 'u32[144,128]{1,0:T(1,128)}', space=vmem, size = 0x12000, scoped, tag = 'internal scratch']
  #allocation2 [shape = 'f32[16,16,36]{2,1,0:T(8,128)}', space=vmem, size = 0x20000, scoped, tag = 'scratch operand']
  %s0 = inlined_call_operand.vmem [shape: f32[2,18,18,4], index: 0, kind: input, shape index: {}]
  %s1 = inlined_call_operand.vmem [shape: f32[36,8], index: 1, kind: input, shape index: {}]
  %s2 = inlined_call_operand.vmem [shape: f32[2,256,8], index: 2, kind: output, shape index: {}]
  %s3 = sld [smem:[#allocation0]]
  $region41: #{conv_relu.1} parent=0
    _
  %s5 = ssub.s32 1, %s3
  %s6 = scalar_select 0, %s5, %s3
  loop: start=0, step=1, limit=4
  $region2: #{conv_relu.1} parent=0 // loop_pre_header
    _
  $region3: #{conv_relu.1} parent=0 // loop_header
    %s8 = sphi 0, %s12
    %p9 = scmp.ge.s32.totalorder %s8, 4
    %s18 = sphi 0, %s20
    %s21 = sphi 0, %s18
    %s22 = sphi 0, %s21
    %s38 = sphi 0, %s22
    %s42 = sphi 0, %s42
    %s44 = sphi 0, %s42
    %s45 = sphi 0, %s44
    %s59 = sphi 0, %s45
    %s65 = sphi 0, %s67
    %s68 = sphi 0, %s65
    %s69 = sphi 0, %s68
    %s85 = sphi 0, %s69
  $region4: #{conv_relu.1} parent=0 // loop_header_branch
    %11 = sbr.rel (%p9) target = $region8
  $region5: #{conv_relu.1} parent=0 // loop_body
    %s13 = ssub.s32 %s8, 1
    %s14 = ssub.s32 %s8, 2
    %s15 = sadd.s32 %s8, 1
    %s16 = ssub.s32 %s8, %s15
    %p17 = scmp.eq.s32.totalorder %s16, 0
    %s19 = sadd.s32 %s18, 1
    %s20 = scalar_select %p17, %s18, %s19
    %p23 = pneg %p17
    %p24 = scmp.eq.s32.totalorder %s8, 1
    %p25 = por %p23, %p24
    %p26 = scmp.ne.s32.totalorder %s18, %s21
    %p27 = scmp.eq.s32.totalorder %s8, 0
    %p28 = por %p26, %p27
    %p29 = scmp.ne.s32.totalorder %s18, %s21
    %p30 = scmp.eq.s32.totalorder %s13, 1
    %p31 = por %p29, %p30
    %p32 = scmp.ne.s32.totalorder %s21, %s22
    %p33 = scmp.eq.s32.totalorder %s13, 0
    %p34 = por %p32, %p33
    %p35 = scmp.ne.s32.totalorder %s21, %s22
    %p36 = scmp.eq.s32.totalorder %s14, 1
    %p37 = por %p35, %p36
    %p39 = scmp.ne.s32.totalorder %s22, %s38
    %p40 = scmp.eq.s32.totalorder %s14, 0
    %p41 = por %p39, %p40
    %s43 = sadd.s32 %s42, 1
    %p46 = scmp.eq.s32.totalorder %s8, 1
    %p47 = scmp.ne.s32.totalorder %s42, %s44
    %p48 = scmp.eq.s32.totalorder %s8, 0
    %p49 = por %p47, %p48
    %p50 = scmp.ne.s32.totalorder %s42, %s44
    %p51 = scmp.eq.s32.totalorder %s13, 1
    %p52 = por %p50, %p51
    %p53 = scmp.ne.s32.totalorder %s44, %s45
    %p54 = scmp.eq.s32.totalorder %s13, 0
    %p55 = por %p53, %p54
    %p56 = scmp.ne.s32.totalorder %s44, %s45
    %p57 = scmp.eq.s32.totalorder %s14, 1
    %p58 = por %p56, %p57
    %p60 = scmp.ne.s32.totalorder %s45, %s59
    %p61 = scmp.eq.s32.totalorder %s14, 0
    %p62 = por %p60, %p61
    %s63 = ssub.s32 %s8, %s15
    %p64 = scmp.eq.s32.totalorder %s63, 0
    %s66 = sadd.s32 %s65, 1
    %s67 = scalar_select %p64, %s65, %s66
    %p70 = pneg %p64
    %p71 = scmp.eq.s32.totalorder %s8, 1
    %p72 = por %p70, %p71
    %p73 = scmp.ne.s32.totalorder %s65, %s68
    %p74 = scmp.eq.s32.totalorder %s8, 0
    %p75 = por %p73, %p74
    %p76 = scmp.ne.s32.totalorder %s65, %s68
    %p77 = scmp.eq.s32.totalorder %s13, 1
    %p78 = por %p76, %p77
    %p79 = scmp.ne.s32.totalorder %s68, %s69
    %p80 = scmp.eq.s32.totalorder %s13, 0
    %p81 = por %p79, %p80
    %p82 = scmp.ne.s32.totalorder %s68, %s69
    %p83 = scmp.eq.s32.totalorder %s14, 1
    %p84 = por %p82, %p83
    %p86 = scmp.ne.s32.totalorder %s69, %s85
    %p87 = scmp.eq.s32.totalorder %s14, 0
    %p88 = por %p86, %p87
    %p89 = scmp.le.s32.totalorder 1, %s8
    %p90 = scmp.lt.s32.totalorder %s8, 3
    %p91 = pnand %p89, %p90
    %p92 = pneg %p91
    // Predicated region
    $region9: #{conv_relu.1} parent=5 // pred_check
      _
    $region10: #{conv_relu.1} parent=5 // pred_check_branch
      %94 = sbr.rel (%p91) target = $region12
    $region11: #{conv_relu.1} parent=5 // pred_region
      %s95 = ssub.s32 %s8, 1
      // Predicated region
      $region13: #{conv_relu.1} parent=11 // pred_check
        %p96 = pneg %p55
      $region14: #{conv_relu.1} parent=11 // pred_check_branch
        %98 = sbr.rel (%p96) target = $region16
      $region15: #{conv_relu.1} parent=11 // pred_region
        _
      $region16: #{conv_relu.1} parent=11 // pred_fallthru
        _
    $region12: #{conv_relu.1} parent=5 // pred_fallthru
      _
    %p99 = scmp.lt.s32.totalorder %s8, 2
    // Predicated region
    $region17: #{conv_relu.1} parent=5 // pred_check
      %p100 = pneg %p99
    $region18: #{conv_relu.1} parent=5 // pred_check_branch
      %102 = sbr.rel (%p100) target = $region20
    $region19: #{conv_relu.1} parent=5 // pred_region
      // Predicated region
      $region21: #{conv_relu.1} parent=19 // pred_check
        %p103 = pneg %p28
      $region22: #{conv_relu.1} parent=19 // pred_check_branch
        %105 = sbr.rel (%p103) target = $region24
      $region23: #{conv_relu.1} parent=19 // pred_region
        %p106 = scmp.lt.s32.totalorder %s8, 1
        %s107 = scalar_select %p106, %s8, 1
        %s108 = smul.addr %s107, 54
        %s109 = smul.addr %s108, 8
        %s110 = scalar_lea.vmem %s0, %s109
      $region24: #{conv_relu.1} parent=19 // pred_fallthru
        _
    $region20: #{conv_relu.1} parent=5 // pred_fallthru
      _
    %p111 = scmp.le.s32.totalorder 1, %s8
    %p112 = scmp.lt.s32.totalorder %s8, 3
    %p113 = pnand %p111, %p112
    %p114 = pneg %p113
    // Predicated region
    $region25: #{conv_relu.1} parent=5 // pred_check
      _
    $region26: #{conv_relu.1} parent=5 // pred_check_branch
      %116 = sbr.rel (%p113) target = $region28
    $region27: #{conv_relu.1} parent=5 // pred_region
      %s117 = ssub.s32 %s8, 1
      %p118 = scmp.lt.s32.totalorder %s13, 1
      %s119 = scalar_select %p118, %s13, 1
      %s120 = smul.addr %s119, 54
      %s121 = smul.addr %s120, 8
      %s122 = scalar_lea.vmem %s0, %s121
      %p123 = pneg %p34
      %p124 = pneg %p31
      %p125 = pneg %p55
      %p126 = pneg %p52
      %p127 = pneg %p81
      %p128 = pneg %p78
      %p129 = scmp.lt.s32.totalorder %s13, 1
      %s130 = scalar_select %p129, %s13, 1
      %s131 = smul.addr %s130, 32
      %s132 = smul.addr %s131, 8
      %s133 = scalar_lea.vmem %s2, %s132
      %p134 = scmp.lt.s32.totalorder %s13, 1
      %s135 = scalar_select %p134, %s13, 1
      %s136 = smul.addr %s135, 54
      %s137 = smul.addr %s136, 8
      %s138 = scalar_lea.vmem %s0, %s137
      %p139 = scmp.lt.s32.totalorder %s13, 1
      %s140 = scalar_select %p139, %s13, 1
      %s141 = smul.addr %s140, 32
      %s142 = smul.addr %s141, 8
      %s143 = scalar_lea.vmem %s2, %s142
      %v144 = vld [vmem:[%s138] sm:$0xff]
      %v145 = vld [vmem:[%s138 + $0x8] sm:$0xff]
      %v146 = vld [vmem:[%s138 + $0x18] sm:$0xff]
      %v147 = vld [vmem:[%s138 + $0x20] sm:$0xff]
      %v148 = vld [vmem:[%s138 + $0x30] sm:$0xff]
      %v149 = vld [vmem:[%s138 + $0x38] sm:$0xff]
      %v150 = vld [vmem:[%s138 + $0x48] sm:$0xff]
      %v151 = vld [vmem:[%s138 + $0x50] sm:$0xff]
      %v152 = vld [vmem:[%s138 + $0x60] sm:$0xff]
      %v153 = vld [vmem:[%s138 + $0x68] sm:$0xff]
      %v154 = vld [vmem:[%s138 + $0x78] sm:$0xff]
      %v155 = vld [vmem:[%s138 + $0x80] sm:$0xff]
      %v156 = vld [vmem:[%s138 + $0x90] sm:$0xff]
      %v157 = vld [vmem:[%s138 + $0x98] sm:$0xff]
      %v158 = vld [vmem:[%s138 + $0xa8] sm:$0xff]
      %v159 = vld [vmem:[%s138 + $0xb0] sm:$0xff]
      %v160 = vld [vmem:[%s138 + $0xc0] sm:$0xff]
      %v161 = vld [vmem:[%s138 + $0xc8] sm:$0xff]
      %v162 = vld [vmem:[%s138 + $0xd8] sm:$0xff]
      %v163 = vld [vmem:[%s138 + $0xe0] sm:$0xff]
      %v164 = vld [vmem:[%s138 + $0xf0] sm:$0xff]
      %v165 = vld [vmem:[%s138 + $0xf8] sm:$0xff]
      %v166 = vld [vmem:[%s138 + $0x108] sm:$0xff]
      %v167 = vld [vmem:[%s138 + $0x110] sm:$0xff]
      %v168 = vld [vmem:[%s138 + $0x120] sm:$0xff]
      %v169 = vld [vmem:[%s138 + $0x128] sm:$0xff]
      %v170 = vld [vmem:[%s138 + $0x138] sm:$0xff]
      %v171 = vld [vmem:[%s138 + $0x140] sm:$0xff]
      %v172 = vld [vmem:[%s138 + $0x150] sm:$0xff]
      %v173 = vld [vmem:[%s138 + $0x158] sm:$0xff]
      %v174 = vld [vmem:[%s138 + $0x168] sm:$0xff]
      %v175 = vld [vmem:[%s138 + $0x170] sm:$0xff]
      %vm176 = vcmask 31744
      %177 = vst.msk [vmem:[#allocation2] sm:$0xff] %vm176, %v144
      %178 = vst.msk [vmem:[#allocation2 + $0x8] sm:$0xff] %vm176, %v145
      %179 = vst.msk [vmem:[#allocation2 + $0x10] sm:$0xff] %vm176, %v146
      %180 = vst.msk [vmem:[#allocation2 + $0x18] sm:$0xff] %vm176, %v147
      %181 = vst.msk [vmem:[#allocation2 + $0x20] sm:$0xff] %vm176, %v148
      %182 = vst.msk [vmem:[#allocation2 + $0x28] sm:$0xff] %vm176, %v149
      %183 = vst.msk [vmem:[#allocation2 + $0x30] sm:$0xff] %vm176, %v150
      %184 = vst.msk [vmem:[#allocation2 + $0x38] sm:$0xff] %vm176, %v151
      %185 = vst.msk [vmem:[#allocation2 + $0x40] sm:$0xff] %vm176, %v152
      %186 = vst.msk [vmem:[#allocation2 + $0x48] sm:$0xff] %vm176, %v153
      %187 = vst.msk [vmem:[#allocation2 + $0x50] sm:$0xff] %vm176, %v154
      %188 = vst.msk [vmem:[#allocation2 + $0x58] sm:$0xff] %vm176, %v155
      %189 = vst.msk [vmem:[#allocation2 + $0x60] sm:$0xff] %vm176, %v156
      %190 = vst.msk [vmem:[#allocation2 + $0x68] sm:$0xff] %vm176, %v157
      %191 = vst.msk [vmem:[#allocation2 + $0x70] sm:$0xff] %vm176, %v158
      %192 = vst.msk [vmem:[#allocation2 + $0x78] sm:$0xff] %vm176, %v159
      %193 = vst.msk [vmem:[#allocation2 + $0x80] sm:$0xff] %vm176, %v160
      %194 = vst.msk [vmem:[#allocation2 + $0x88] sm:$0xff] %vm176, %v161
      %195 = vst.msk [vmem:[#allocation2 + $0x90] sm:$0xff] %vm176, %v162
      %196 = vst.msk [vmem:[#allocation2 + $0x98] sm:$0xff] %vm176, %v163
      %197 = vst.msk [vmem:[#allocation2 + $0xa0] sm:$0xff] %vm176, %v164
      %198 = vst.msk [vmem:[#allocation2 + $0xa8] sm:$0xff] %vm176, %v165
      %199 = vst.msk [vmem:[#allocation2 + $0xb0] sm:$0xff] %vm176, %v166
      %200 = vst.msk [vmem:[#allocation2 + $0xb8] sm:$0xff] %vm176, %v167
      %201 = vst.msk [vmem:[#allocation2 + $0xc0] sm:$0xff] %vm176, %v168
      %202 = vst.msk [vmem:[#allocation2 + $0xc8] sm:$0xff] %vm176, %v169
      %203 = vst.msk [vmem:[#allocation2 + $0xd0] sm:$0xff] %vm176, %v170
      %204 = vst.msk [vmem:[#allocation2 + $0xd8] sm:$0xff] %vm176, %v171
      %205 = vst.msk [vmem:[#allocation2 + $0xe0] sm:$0xff] %vm176, %v172
      %206 = vst.msk [vmem:[#allocation2 + $0xe8] sm:$0xff] %vm176, %v173
      %207 = vst.msk [vmem:[#allocation2 + $0xf0] sm:$0xff] %vm176, %v174
      %208 = vst.msk [vmem:[#allocation2 + $0xf8] sm:$0xff] %vm176, %v175
      %v209 = vld [vmem:[%s138 + $0x1] sm:$0xff]
      %v210 = vld [vmem:[%s138 + $0x9] sm:$0xff]
      %v211 = vld [vmem:[%s138 + $0x19] sm:$0xff]
      %v212 = vld [vmem:[%s138 + $0x21] sm:$0xff]
      %v213 = vld [vmem:[%s138 + $0x31] sm:$0xff]
      %v214 = vld [vmem:[%s138 + $0x39] sm:$0xff]
      %v215 = vld [vmem:[%s138 + $0x49] sm:$0xff]
      %v216 = vld [vmem:[%s138 + $0x51] sm:$0xff]
      %v217 = vld [vmem:[%s138 + $0x61] sm:$0xff]
      %v218 = vld [vmem:[%s138 + $0x69] sm:$0xff]
      %v219 = vld [vmem:[%s138 + $0x79] sm:$0xff]
      %v220 = vld [vmem:[%s138 + $0x81] sm:$0xff]
      %v221 = vld [vmem:[%s138 + $0x91] sm:$0xff]
      %v222 = vld [vmem:[%s138 + $0x99] sm:$0xff]
      %v223 = vld [vmem:[%s138 + $0xa9] sm:$0xff]
      %v224 = vld [vmem:[%s138 + $0xb1] sm:$0xff]
      %v225 = vld [vmem:[%s138 + $0xc1] sm:$0xff]
      %v226 = vld [vmem:[%s138 + $0xc9] sm:$0xff]
      %v227 = vld [vmem:[%s138 + $0xd9] sm:$0xff]
      %v228 = vld [vmem:[%s138 + $0xe1] sm:$0xff]
      %v229 = vld [vmem:[%s138 + $0xf1] sm:$0xff]
      %v230 = vld [vmem:[%s138 + $0xf9] sm:$0xff]
      %v231 = vld [vmem:[%s138 + $0x109] sm:$0xff]
      %v232 = vld [vmem:[%s138 + $0x111] sm:$0xff]
      %v233 = vld [vmem:[%s138 + $0x121] sm:$0xff]
      %v234 = vld [vmem:[%s138 + $0x129] sm:$0xff]
      %v235 = vld [vmem:[%s138 + $0x139] sm:$0xff]
      %v236 = vld [vmem:[%s138 + $0x141] sm:$0xff]
      %v237 = vld [vmem:[%s138 + $0x151] sm:$0xff]
      %v238 = vld [vmem:[%s138 + $0x159] sm:$0xff]
      %v239 = vld [vmem:[%s138 + $0x169] sm:$0xff]
      %v240 = vld [vmem:[%s138 + $0x171] sm:$0xff]
      %273 = vrot.lane.b32.xlu0 %v209, 4
      %v274 = vpop.permute.xlu0 %273
      %275 = vrot.lane.b32.xlu0 %v210, 4
      %v276 = vpop.permute.xlu0 %275
      %277 = vrot.lane.b32.xlu0 %v211, 4
      %v278 = vpop.permute.xlu0 %277
      %279 = vrot.lane.b32.xlu0 %v212, 4
      %v280 = vpop.permute.xlu0 %279
      %281 = vrot.lane.b32.xlu0 %v213, 4
      %v282 = vpop.permute.xlu0 %281
      %283 = vrot.lane.b32.xlu0 %v214, 4
      %v284 = vpop.permute.xlu0 %283
      %285 = vrot.lane.b32.xlu0 %v215, 4
      %v286 = vpop.permute.xlu0 %285
      %287 = vrot.lane.b32.xlu0 %v216, 4
      %v288 = vpop.permute.xlu0 %287
      %289 = vrot.lane.b32.xlu0 %v217, 4
      %v290 = vpop.permute.xlu0 %289
      %291 = vrot.lane.b32.xlu0 %v218, 4
      %v292 = vpop.permute.xlu0 %291
      %293 = vrot.lane.b32.xlu0 %v219, 4
      %v294 = vpop.permute.xlu0 %293
      %295 = vrot.lane.b32.xlu0 %v220, 4
      %v296 = vpop.permute.xlu0 %295
      %297 = vrot.lane.b32.xlu0 %v221, 4
      %v298 = vpop.permute.xlu0 %297
      %299 = vrot.lane.b32.xlu0 %v222, 4
      %v300 = vpop.permute.xlu0 %299
      %301 = vrot.lane.b32.xlu0 %v223, 4
      %v302 = vpop.permute.xlu0 %301
      %303 = vrot.lane.b32.xlu0 %v224, 4
      %v304 = vpop.permute.xlu0 %303
      %305 = vrot.lane.b32.xlu0 %v225, 4
      %v306 = vpop.permute.xlu0 %305
      %307 = vrot.lane.b32.xlu0 %v226, 4
      %v308 = vpop.permute.xlu0 %307
      %309 = vrot.lane.b32.xlu0 %v227, 4
      %v310 = vpop.permute.xlu0 %309
      %311 = vrot.lane.b32.xlu0 %v228, 4
      %v312 = vpop.permute.xlu0 %311
      %313 = vrot.lane.b32.xlu0 %v229, 4
      %v314 = vpop.permute.xlu0 %313
      %315 = vrot.lane.b32.xlu0 %v230, 4
      %v316 = vpop.permute.xlu0 %315
      %317 = vrot.lane.b32.xlu0 %v231, 4
      %v318 = vpop.permute.xlu0 %317
      %319 = vrot.lane.b32.xlu0 %v232, 4
      %v320 = vpop.permute.xlu0 %319
      %321 = vrot.lane.b32.xlu0 %v233, 4
      %v322 = vpop.permute.xlu0 %321
      %323 = vrot.lane.b32.xlu0 %v234, 4
      %v324 = vpop.permute.xlu0 %323
      %325 = vrot.lane.b32.xlu0 %v235, 4
      %v326 = vpop.permute.xlu0 %325
      %327 = vrot.lane.b32.xlu0 %v236, 4
      %v328 = vpop.permute.xlu0 %327
      %329 = vrot.lane.b32.xlu0 %v237, 4
      %v330 = vpop.permute.xlu0 %329
      %331 = vrot.lane.b32.xlu0 %v238, 4
      %v332 = vpop.permute.xlu0 %331
      %333 = vrot.lane.b32.xlu0 %v239, 4
      %v334 = vpop.permute.xlu0 %333
      %335 = vrot.lane.b32.xlu0 %v240, 4
      %v336 = vpop.permute.xlu0 %335
      %vm369 = vcmask 64544
      %370 = vst.msk [vmem:[#allocation2] sm:$0xff] %vm369, %v274
      %371 = vst.msk [vmem:[#allocation2 + $0x8] sm:$0xff] %vm369, %v276
      %372 = vst.msk [vmem:[#allocation2 + $0x10] sm:$0xff] %vm369, %v278
      %373 = vst.msk [vmem:[#allocation2 + $0x18] sm:$0xff] %vm369, %v280
      %374 = vst.msk [vmem:[#allocation2 + $0x20] sm:$0xff] %vm369, %v282
      %375 = vst.msk [vmem:[#allocation2 + $0x28] sm:$0xff] %vm369, %v284
      %376 = vst.msk [vmem:[#allocation2 + $0x30] sm:$0xff] %vm369, %v286
      %377 = vst.msk [vmem:[#allocation2 + $0x38] sm:$0xff] %vm369, %v288
      %378 = vst.msk [vmem:[#allocation2 + $0x40] sm:$0xff] %vm369, %v290
      %379 = vst.msk [vmem:[#allocation2 + $0x48] sm:$0xff] %vm369, %v292
      %380 = vst.msk [vmem:[#allocation2 + $0x50] sm:$0xff] %vm369, %v294
      %381 = vst.msk [vmem:[#allocation2 + $0x58] sm:$0xff] %vm369, %v296
      %382 = vst.msk [vmem:[#allocation2 + $0x60] sm:$0xff] %vm369, %v298
      %383 = vst.msk [vmem:[#allocation2 + $0x68] sm:$0xff] %vm369, %v300
      %384 = vst.msk [vmem:[#allocation2 + $0x70] sm:$0xff] %vm369, %v302
      %385 = vst.msk [vmem:[#allocation2 + $0x78] sm:$0xff] %vm369, %v304
      %386 = vst.msk [vmem:[#allocation2 + $0x80] sm:$0xff] %vm369, %v306
      %387 = vst.msk [vmem:[#allocation2 + $0x88] sm:$0xff] %vm369, %v308
      %388 = vst.msk [vmem:[#allocation2 + $0x90] sm:$0xff] %vm369, %v310
      %389 = vst.msk [vmem:[#allocation2 + $0x98] sm:$0xff] %vm369, %v312
      %390 = vst.msk [vmem:[#allocation2 + $0xa0] sm:$0xff] %vm369, %v314
      %391 = vst.msk [vmem:[#allocation2 + $0xa8] sm:$0xff] %vm369, %v316
      %392 = vst.msk [vmem:[#allocation2 + $0xb0] sm:$0xff] %vm369, %v318
      %393 = vst.msk [vmem:[#allocation2 + $0xb8] sm:$0xff] %vm369, %v320
      %394 = vst.msk [vmem:[#allocation2 + $0xc0] sm:$0xff] %vm369, %v322
      %395 = vst.msk [vmem:[#allocation2 + $0xc8] sm:$0xff] %vm369, %v324
      %396 = vst.msk [vmem:[#allocation2 + $0xd0] sm:$0xff] %vm369, %v326
      %397 = vst.msk [vmem:[#allocation2 + $0xd8] sm:$0xff] %vm369, %v328
      %398 = vst.msk [vmem:[#allocation2 + $0xe0] sm:$0xff] %vm369, %v330
      %399 = vst.msk [vmem:[#allocation2 + $0xe8] sm:$0xff] %vm369, %v332
      %400 = vst.msk [vmem:[#allocation2 + $0xf0] sm:$0xff] %vm369, %v334
      %401 = vst.msk [vmem:[#allocation2 + $0xf8] sm:$0xff] %vm369, %v336
      %v402 = vld [vmem:[%s138 + $0x2] sm:$0xff]
      %v403 = vld [vmem:[%s138 + $0xa] sm:$0xff]
      %v404 = vld [vmem:[%s138 + $0x1a] sm:$0xff]
      %v405 = vld [vmem:[%s138 + $0x22] sm:$0xff]
      %v406 = vld [vmem:[%s138 + $0x32] sm:$0xff]
      %v407 = vld [vmem:[%s138 + $0x3a] sm:$0xff]
      %v408 = vld [vmem:[%s138 + $0x4a] sm:$0xff]
      %v409 = vld [vmem:[%s138 + $0x52] sm:$0xff]
      %v410 = vld [vmem:[%s138 + $0x62] sm:$0xff]
      %v411 = vld [vmem:[%s138 + $0x6a] sm:$0xff]
      %v412 = vld [vmem:[%s138 + $0x7a] sm:$0xff]
      %v413 = vld [vmem:[%s138 + $0x82] sm:$0xff]
      %v414 = vld [vmem:[%s138 + $0x92] sm:$0xff]
      %v415 = vld [vmem:[%s138 + $0x9a] sm:$0xff]
      %v416 = vld [vmem:[%s138 + $0xaa] sm:$0xff]
      %v417 = vld [vmem:[%s138 + $0xb2] sm:$0xff]
      %v418 = vld [vmem:[%s138 + $0xc2] sm:$0xff]
      %v419 = vld [vmem:[%s138 + $0xca] sm:$0xff]
      %v420 = vld [vmem:[%s138 + $0xda] sm:$0xff]
      %v421 = vld [vmem:[%s138 + $0xe2] sm:$0xff]
      %v422 = vld [vmem:[%s138 + $0xf2] sm:$0xff]
      %v423 = vld [vmem:[%s138 + $0xfa] sm:$0xff]
      %v424 = vld [vmem:[%s138 + $0x10a] sm:$0xff]
      %v425 = vld [vmem:[%s138 + $0x112] sm:$0xff]
      %v426 = vld [vmem:[%s138 + $0x122] sm:$0xff]
      %v427 = vld [vmem:[%s138 + $0x12a] sm:$0xff]
      %v428 = vld [vmem:[%s138 + $0x13a] sm:$0xff]
      %v429 = vld [vmem:[%s138 + $0x142] sm:$0xff]
      %v430 = vld [vmem:[%s138 + $0x152] sm:$0xff]
      %v431 = vld [vmem:[%s138 + $0x15a] sm:$0xff]
      %v432 = vld [vmem:[%s138 + $0x16a] sm:$0xff]
      %v433 = vld [vmem:[%s138 + $0x172] sm:$0xff]
      %466 = vrot.lane.b32.xlu0 %v402, 8
      %v467 = vpop.permute.xlu0 %466
      %468 = vrot.lane.b32.xlu0 %v403, 8
      %v469 = vpop.permute.xlu0 %468
      %470 = vrot.lane.b32.xlu0 %v404, 8
      %v471 = vpop.permute.xlu0 %470
      %472 = vrot.lane.b32.xlu0 %v405, 8
      %v473 = vpop.permute.xlu0 %472
      %474 = vrot.lane.b32.xlu0 %v406, 8
      %v475 = vpop.permute.xlu0 %474
      %476 = vrot.lane.b32.xlu0 %v407, 8
      %v477 = vpop.permute.xlu0 %476
      %478 = vrot.lane.b32.xlu0 %v408, 8
      %v479 = vpop.permute.xlu0 %478
      %480 = vrot.lane.b32.xlu0 %v409, 8
      %v481 = vpop.permute.xlu0 %480
      %482 = vrot.lane.b32.xlu0 %v410, 8
      %v483 = vpop.permute.xlu0 %482
      %484 = vrot.lane.b32.xlu0 %v411, 8
      %v485 = vpop.permute.xlu0 %484
      %486 = vrot.lane.b32.xlu0 %v412, 8
      %v487 = vpop.permute.xlu0 %486
      %488 = vrot.lane.b32.xlu0 %v413, 8
      %v489 = vpop.permute.xlu0 %488
      %490 = vrot.lane.b32.xlu0 %v414, 8
      %v491 = vpop.permute.xlu0 %490
      %492 = vrot.lane.b32.xlu0 %v415, 8
      %v493 = vpop.permute.xlu0 %492
      %494 = vrot.lane.b32.xlu0 %v416, 8
      %v495 = vpop.permute.xlu0 %494
      %496 = vrot.lane.b32.xlu0 %v417, 8
      %v497 = vpop.permute.xlu0 %496
      %498 = vrot.lane.b32.xlu0 %v418, 8
      %v499 = vpop.permute.xlu0 %498
      %500 = vrot.lane.b32.xlu0 %v419, 8
      %v501 = vpop.permute.xlu0 %500
      %502 = vrot.lane.b32.xlu0 %v420, 8
      %v503 = vpop.permute.xlu0 %502
      %504 = vrot.lane.b32.xlu0 %v421, 8
      %v505 = vpop.permute.xlu0 %504
      %506 = vrot.lane.b32.xlu0 %v422, 8
      %v507 = vpop.permute.xlu0 %506
      %508 = vrot.lane.b32.xlu0 %v423, 8
      %v509 = vpop.permute.xlu0 %508
      %510 = vrot.lane.b32.xlu0 %v424, 8
      %v511 = vpop.permute.xlu0 %510
      %512 = vrot.lane.b32.xlu0 %v425, 8
      %v513 = vpop.permute.xlu0 %512
      %514 = vrot.lane.b32.xlu0 %v426, 8
      %v515 = vpop.permute.xlu0 %514
      %516 = vrot.lane.b32.xlu0 %v427, 8
      %v517 = vpop.permute.xlu0 %516
      %518 = vrot.lane.b32.xlu0 %v428, 8
      %v519 = vpop.permute.xlu0 %518
      %520 = vrot.lane.b32.xlu0 %v429, 8
      %v521 = vpop.permute.xlu0 %520
      %522 = vrot.lane.b32.xlu0 %v430, 8
      %v523 = vpop.permute.xlu0 %522
      %524 = vrot.lane.b32.xlu0 %v431, 8
      %v525 = vpop.permute.xlu0 %524
      %526 = vrot.lane.b32.xlu0 %v432, 8
      %v527 = vpop.permute.xlu0 %526
      %528 = vrot.lane.b32.xlu0 %v433, 8
      %v529 = vpop.permute.xlu0 %528
      %vm562 = vcmask 97344
      %563 = vst.msk [vmem:[#allocation2] sm:$0xff] %vm562, %v467
      %564 = vst.msk [vmem:[#allocation2 + $0x8] sm:$0xff] %vm562, %v469
      %565 = vst.msk [vmem:[#allocation2 + $0x10] sm:$0xff] %vm562, %v471
      %566 = vst.msk [vmem:[#allocation2 + $0x18] sm:$0xff] %vm562, %v473
      %567 = vst.msk [vmem:[#allocation2 + $0x20] sm:$0xff] %vm562, %v475
      %568 = vst.msk [vmem:[#allocation2 + $0x28] sm:$0xff] %vm562, %v477
      %569 = vst.msk [vmem:[#allocation2 + $0x30] sm:$0xff] %vm562, %v479
      %570 = vst.msk [vmem:[#allocation2 + $0x38] sm:$0xff] %vm562, %v481
      %571 = vst.msk [vmem:[#allocation2 + $0x40] sm:$0xff] %vm562, %v483
      %572 = vst.msk [vmem:[#allocation2 + $0x48] sm:$0xff] %vm562, %v485
      %573 = vst.msk [vmem:[#allocation2 + $0x50] sm:$0xff] %vm562, %v487
      %574 = vst.msk [vmem:[#allocation2 + $0x58] sm:$0xff] %vm562, %v489
      %575 = vst.msk [vmem:[#allocation2 + $0x60] sm:$0xff] %vm562, %v491
      %576 = vst.msk [vmem:[#allocation2 + $0x68] sm:$0xff] %vm562, %v493
      %577 = vst.msk [vmem:[#allocation2 + $0x70] sm:$0xff] %vm562, %v495
      %578 = vst.msk [vmem:[#allocation2 + $0x78] sm:$0xff] %vm562, %v497
      %579 = vst.msk [vmem:[#allocation2 + $0x80] sm:$0xff] %vm562, %v499
      %580 = vst.msk [vmem:[#allocation2 + $0x88] sm:$0xff] %vm562, %v501
      %581 = vst.msk [vmem:[#allocation2 + $0x90] sm:$0xff] %vm562, %v503
      %582 = vst.msk [vmem:[#allocation2 + $0x98] sm:$0xff] %vm562, %v505
      %583 = vst.msk [vmem:[#allocation2 + $0xa0] sm:$0xff] %vm562, %v507
      %584 = vst.msk [vmem:[#allocation2 + $0xa8] sm:$0xff] %vm562, %v509
      %585 = vst.msk [vmem:[#allocation2 + $0xb0] sm:$0xff] %vm562, %v511
      %586 = vst.msk [vmem:[#allocation2 + $0xb8] sm:$0xff] %vm562, %v513
      %587 = vst.msk [vmem:[#allocation2 + $0xc0] sm:$0xff] %vm562, %v515
      %588 = vst.msk [vmem:[#allocation2 + $0xc8] sm:$0xff] %vm562, %v517
      %589 = vst.msk [vmem:[#allocation2 + $0xd0] sm:$0xff] %vm562, %v519
      %590 = vst.msk [vmem:[#allocation2 + $0xd8] sm:$0xff] %vm562, %v521
      %591 = vst.msk [vmem:[#allocation2 + $0xe0] sm:$0xff] %vm562, %v523
      %592 = vst.msk [vmem:[#allocation2 + $0xe8] sm:$0xff] %vm562, %v525
      %593 = vst.msk [vmem:[#allocation2 + $0xf0] sm:$0xff] %vm562, %v527
      %594 = vst.msk [vmem:[#allocation2 + $0xf8] sm:$0xff] %vm562, %v529
      %s595 = scalar_lea.vmem %s138, 24
      %v596 = vld [vmem:[%s595] sm:$0xff]
      %v597 = vld [vmem:[%s595 + $0x8] sm:$0xff]
      %v598 = vld [vmem:[%s595 + $0x18] sm:$0xff]
      %v599 = vld [vmem:[%s595 + $0x20] sm:$0xff]
      %v600 = vld [vmem:[%s595 + $0x30] sm:$0xff]
      %v601 = vld [vmem:[%s595 + $0x38] sm:$0xff]
      %v602 = vld [vmem:[%s595 + $0x48] sm:$0xff]
      %v603 = vld [vmem:[%s595 + $0x50] sm:$0xff]
      %v604 = vld [vmem:[%s595 + $0x60] sm:$0xff]
      %v605 = vld [vmem:[%s595 + $0x68] sm:$0xff]
      %v606 = vld [vmem:[%s595 + $0x78] sm:$0xff]
      %v607 = vld [vmem:[%s595 + $0x80] sm:$0xff]
      %v608 = vld [vmem:[%s595 + $0x90] sm:$0xff]
      %v609 = vld [vmem:[%s595 + $0x98] sm:$0xff]
      %v610 = vld [vmem:[%s595 + $0xa8] sm:$0xff]
      %v611 = vld [vmem:[%s595 + $0xb0] sm:$0xff]
      %v612 = vld [vmem:[%s595 + $0xc0] sm:$0xff]
      %v613 = vld [vmem:[%s595 + $0xc8] sm:$0xff]
      %v614 = vld [vmem:[%s595 + $0xd8] sm:$0xff]
      %v615 = vld [vmem:[%s595 + $0xe0] sm:$0xff]
      %v616 = vld [vmem:[%s595 + $0xf0] sm:$0xff]
      %v617 = vld [vmem:[%s595 + $0xf8] sm:$0xff]
      %v618 = vld [vmem:[%s595 + $0x108] sm:$0xff]
      %v619 = vld [vmem:[%s595 + $0x110] sm:$0xff]
      %v620 = vld [vmem:[%s595 + $0x120] sm:$0xff]
      %v621 = vld [vmem:[%s595 + $0x128] sm:$0xff]
      %v622 = vld [vmem:[%s595 + $0x138] sm:$0xff]
      %v623 = vld [vmem:[%s595 + $0x140] sm:$0xff]
      %v624 = vld [vmem:[%s595 + $0x150] sm:$0xff]
      %v625 = vld [vmem:[%s595 + $0x158] sm:$0xff]
      %v626 = vld [vmem:[%s595 + $0x168] sm:$0xff]
      %v627 = vld [vmem:[%s595 + $0x170] sm:$0xff]
      %660 = vrot.lane.b32.xlu0 %v596, 12
      %v661 = vpop.permute.xlu0 %660
      %662 = vrot.lane.b32.xlu0 %v597, 12
      %v663 = vpop.permute.xlu0 %662
      %664 = vrot.lane.b32.xlu0 %v598, 12
      %v665 = vpop.permute.xlu0 %664
      %666 = vrot.lane.b32.xlu0 %v599, 12
      %v667 = vpop.permute.xlu0 %666
      %668 = vrot.lane.b32.xlu0 %v600, 12
      %v669 = vpop.permute.xlu0 %668
      %670 = vrot.lane.b32.xlu0 %v601, 12
      %v671 = vpop.permute.xlu0 %670
      %672 = vrot.lane.b32.xlu0 %v602, 12
      %v673 = vpop.permute.xlu0 %672
      %674 = vrot.lane.b32.xlu0 %v603, 12
      %v675 = vpop.permute.xlu0 %674
      %676 = vrot.lane.b32.xlu0 %v604, 12
      %v677 = vpop.permute.xlu0 %676
      %678 = vrot.lane.b32.xlu0 %v605, 12
      %v679 = vpop.permute.xlu0 %678
      %680 = vrot.lane.b32.xlu0 %v606, 12
      %v681 = vpop.permute.xlu0 %680
      %682 = vrot.lane.b32.xlu0 %v607, 12
      %v683 = vpop.permute.xlu0 %682
      %684 = vrot.lane.b32.xlu0 %v608, 12
      %v685 = vpop.permute.xlu0 %684
      %686 = vrot.lane.b32.xlu0 %v609, 12
      %v687 = vpop.permute.xlu0 %686
      %688 = vrot.lane.b32.xlu0 %v610, 12
      %v689 = vpop.permute.xlu0 %688
      %690 = vrot.lane.b32.xlu0 %v611, 12
      %v691 = vpop.permute.xlu0 %690
      %692 = vrot.lane.b32.xlu0 %v612, 12
      %v693 = vpop.permute.xlu0 %692
      %694 = vrot.lane.b32.xlu0 %v613, 12
      %v695 = vpop.permute.xlu0 %694
      %696 = vrot.lane.b32.xlu0 %v614, 12
      %v697 = vpop.permute.xlu0 %696
      %698 = vrot.lane.b32.xlu0 %v615, 12
      %v699 = vpop.permute.xlu0 %698
      %700 = vrot.lane.b32.xlu0 %v616, 12
      %v701 = vpop.permute.xlu0 %700
      %702 = vrot.lane.b32.xlu0 %v617, 12
      %v703 = vpop.permute.xlu0 %702
      %704 = vrot.lane.b32.xlu0 %v618, 12
      %v705 = vpop.permute.xlu0 %704
      %706 = vrot.lane.b32.xlu0 %v619, 12
      %v707 = vpop.permute.xlu0 %706
      %708 = vrot.lane.b32.xlu0 %v620, 12
      %v709 = vpop.permute.xlu0 %708
      %710 = vrot.lane.b32.xlu0 %v621, 12
      %v711 = vpop.permute.xlu0 %710
      %712 = vrot.lane.b32.xlu0 %v622, 12
      %v713 = vpop.permute.xlu0 %712
      %714 = vrot.lane.b32.xlu0 %v623, 12
      %v715 = vpop.permute.xlu0 %714
      %716 = vrot.lane.b32.xlu0 %v624, 12
      %v717 = vpop.permute.xlu0 %716
      %718 = vrot.lane.b32.xlu0 %v625, 12
      %v719 = vpop.permute.xlu0 %718
      %720 = vrot.lane.b32.xlu0 %v626, 12
      %v721 = vpop.permute.xlu0 %720
      %722 = vrot.lane.b32.xlu0 %v627, 12
      %v723 = vpop.permute.xlu0 %722
      %vm756 = vcmask 130144
      %757 = vst.msk [vmem:[#allocation2] sm:$0xff] %vm756, %v661
      %758 = vst.msk [vmem:[#allocation2 + $0x8] sm:$0xff] %vm756, %v663
      %759 = vst.msk [vmem:[#allocation2 + $0x10] sm:$0xff] %vm756, %v665
      %760 = vst.msk [vmem:[#allocation2 + $0x18] sm:$0xff] %vm756, %v667
      %761 = vst.msk [vmem:[#allocation2 + $0x20] sm:$0xff] %vm756, %v669
      %762 = vst.msk [vmem:[#allocation2 + $0x28] sm:$0xff] %vm756, %v671
      %763 = vst.msk [vmem:[#allocation2 + $0x30] sm:$0xff] %vm756, %v673
      %764 = vst.msk [vmem:[#allocation2 + $0x38] sm:$0xff] %vm756, %v675
      %765 = vst.msk [vmem:[#allocation2 + $0x40] sm:$0xff] %vm756, %v677
      %766 = vst.msk [vmem:[#allocation2 + $0x48] sm:$0xff] %vm756, %v679
      %767 = vst.msk [vmem:[#allocation2 + $0x50] sm:$0xff] %vm756, %v681
      %768 = vst.msk [vmem:[#allocation2 + $0x58] sm:$0xff] %vm756, %v683
      %769 = vst.msk [vmem:[#allocation2 + $0x60] sm:$0xff] %vm756, %v685
      %770 = vst.msk [vmem:[#allocation2 + $0x68] sm:$0xff] %vm756, %v687
      %771 = vst.msk [vmem:[#allocation2 + $0x70] sm:$0xff] %vm756, %v689
      %772 = vst.msk [vmem:[#allocation2 + $0x78] sm:$0xff] %vm756, %v691
      %773 = vst.msk [vmem:[#allocation2 + $0x80] sm:$0xff] %vm756, %v693
      %774 = vst.msk [vmem:[#allocation2 + $0x88] sm:$0xff] %vm756, %v695
      %775 = vst.msk [vmem:[#allocation2 + $0x90] sm:$0xff] %vm756, %v697
      %776 = vst.msk [vmem:[#allocation2 + $0x98] sm:$0xff] %vm756, %v699
      %777 = vst.msk [vmem:[#allocation2 + $0xa0] sm:$0xff] %vm756, %v701
      %778 = vst.msk [vmem:[#allocation2 + $0xa8] sm:$0xff] %vm756, %v703
      %779 = vst.msk [vmem:[#allocation2 + $0xb0] sm:$0xff] %vm756, %v705
      %780 = vst.msk [vmem:[#allocation2 + $0xb8] sm:$0xff] %vm756, %v707
      %781 = vst.msk [vmem:[#allocation2 + $0xc0] sm:$0xff] %vm756, %v709
      %782 = vst.msk [vmem:[#allocation2 + $0xc8] sm:$0xff] %vm756, %v711
      %783 = vst.msk [vmem:[#allocation2 + $0xd0] sm:$0xff] %vm756, %v713
      %784 = vst.msk [vmem:[#allocation2 + $0xd8] sm:$0xff] %vm756, %v715
      %785 = vst.msk [vmem:[#allocation2 + $0xe0] sm:$0xff] %vm756, %v717
      %786 = vst.msk [vmem:[#allocation2 + $0xe8] sm:$0xff] %vm756, %v719
      %787 = vst.msk [vmem:[#allocation2 + $0xf0] sm:$0xff] %vm756, %v721
      %788 = vst.msk [vmem:[#allocation2 + $0xf8] sm:$0xff] %vm756, %v723
      %v789 = vld [vmem:[%s595 + $0x1] sm:$0xff]
      %v790 = vld [vmem:[%s595 + $0x9] sm:$0xff]
      %v791 = vld [vmem:[%s595 + $0x19] sm:$0xff]
      %v792 = vld [vmem:[%s595 + $0x21] sm:$0xff]
      %v793 = vld [vmem:[%s595 + $0x31] sm:$0xff]
      %v794 = vld [vmem:[%s595 + $0x39] sm:$0xff]
      %v795 = vld [vmem:[%s595 + $0x49] sm:$0xff]
      %v796 = vld [vmem:[%s595 + $0x51] sm:$0xff]
      %v797 = vld [vmem:[%s595 + $0x61] sm:$0xff]
      %v798 = vld [vmem:[%s595 + $0x69] sm:$0xff]
      %v799 = vld [vmem:[%s595 + $0x79] sm:$0xff]
      %v800 = vld [vmem:[%s595 + $0x81] sm:$0xff]
      %v801 = vld [vmem:[%s595 + $0x91] sm:$0xff]
      %v802 = vld [vmem:[%s595 + $0x99] sm:$0xff]
      %v803 = vld [vmem:[%s595 + $0xa9] sm:$0xff]
      %v804 = vld [vmem:[%s595 + $0xb1] sm:$0xff]
      %v805 = vld [vmem:[%s595 + $0xc1] sm:$0xff]
      %v806 = vld [vmem:[%s595 + $0xc9] sm:$0xff]
      %v807 = vld [vmem:[%s595 + $0xd9] sm:$0xff]
      %v808 = vld [vmem:[%s595 + $0xe1] sm:$0xff]
      %v809 = vld [vmem:[%s595 + $0xf1] sm:$0xff]
      %v810 = vld [vmem:[%s595 + $0xf9] sm:$0xff]
      %v811 = vld [vmem:[%s595 + $0x109] sm:$0xff]
      %v812 = vld [vmem:[%s595 + $0x111] sm:$0xff]
      %v813 = vld [vmem:[%s595 + $0x121] sm:$0xff]
      %v814 = vld [vmem:[%s595 + $0x129] sm:$0xff]
      %v815 = vld [vmem:[%s595 + $0x139] sm:$0xff]
      %v816 = vld [vmem:[%s595 + $0x141] sm:$0xff]
      %v817 = vld [vmem:[%s595 + $0x151] sm:$0xff]
      %v818 = vld [vmem:[%s595 + $0x159] sm:$0xff]
      %v819 = vld [vmem:[%s595 + $0x169] sm:$0xff]
      %v820 = vld [vmem:[%s595 + $0x171] sm:$0xff]
      %853 = vrot.lane.b32.xlu0 %v789, 16
      %v854 = vpop.permute.xlu0 %853
      %855 = vrot.lane.b32.xlu0 %v790, 16
      %v856 = vpop.permute.xlu0 %855
      %857 = vrot.lane.b32.xlu0 %v791, 16
      %v858 = vpop.permute.xlu0 %857
      %859 = vrot.lane.b32.xlu0 %v792, 16
      %v860 = vpop.permute.xlu0 %859
      %861 = vrot.lane.b32.xlu0 %v793, 16
      %v862 = vpop.permute.xlu0 %861
      %863 = vrot.lane.b32.xlu0 %v794, 16
      %v864 = vpop.permute.xlu0 %863
      %865 = vrot.lane.b32.xlu0 %v795, 16
      %v866 = vpop.permute.xlu0 %865
      %867 = vrot.lane.b32.xlu0 %v796, 16
      %v868 = vpop.permute.xlu0 %867
      %869 = vrot.lane.b32.xlu0 %v797, 16
      %v870 = vpop.permute.xlu0 %869
      %871 = vrot.lane.b32.xlu0 %v798, 16
      %v872 = vpop.permute.xlu0 %871
      %873 = vrot.lane.b32.xlu0 %v799, 16
      %v874 = vpop.permute.xlu0 %873
      %875 = vrot.lane.b32.xlu0 %v800, 16
      %v876 = vpop.permute.xlu0 %875
      %877 = vrot.lane.b32.xlu0 %v801, 16
      %v878 = vpop.permute.xlu0 %877
      %879 = vrot.lane.b32.xlu0 %v802, 16
      %v880 = vpop.permute.xlu0 %879
      %881 = vrot.lane.b32.xlu0 %v803, 16
      %v882 = vpop.permute.xlu0 %881
      %883 = vrot.lane.b32.xlu0 %v804, 16
      %v884 = vpop.permute.xlu0 %883
      %885 = vrot.lane.b32.xlu0 %v805, 16
      %v886 = vpop.permute.xlu0 %885
      %887 = vrot.lane.b32.xlu0 %v806, 16
      %v888 = vpop.permute.xlu0 %887
      %889 = vrot.lane.b32.xlu0 %v807, 16
      %v890 = vpop.permute.xlu0 %889
      %891 = vrot.lane.b32.xlu0 %v808, 16
      %v892 = vpop.permute.xlu0 %891
      %893 = vrot.lane.b32.xlu0 %v809, 16
      %v894 = vpop.permute.xlu0 %893
      %895 = vrot.lane.b32.xlu0 %v810, 16
      %v896 = vpop.permute.xlu0 %895
      %897 = vrot.lane.b32.xlu0 %v811, 16
      %v898 = vpop.permute.xlu0 %897
      %899 = vrot.lane.b32.xlu0 %v812, 16
      %v900 = vpop.permute.xlu0 %899
      %901 = vrot.lane.b32.xlu0 %v813, 16
      %v902 = vpop.permute.xlu0 %901
      %903 = vrot.lane.b32.xlu0 %v814, 16
      %v904 = vpop.permute.xlu0 %903
      %905 = vrot.lane.b32.xlu0 %v815, 16
      %v906 = vpop.permute.xlu0 %905
      %907 = vrot.lane.b32.xlu0 %v816, 16
      %v908 = vpop.permute.xlu0 %907
      %909 = vrot.lane.b32.xlu0 %v817, 16
      %v910 = vpop.permute.xlu0 %909
      %911 = vrot.lane.b32.xlu0 %v818, 16
      %v912 = vpop.permute.xlu0 %911
      %913 = vrot.lane.b32.xlu0 %v819, 16
      %v914 = vpop.permute.xlu0 %913
      %915 = vrot.lane.b32.xlu0 %v820, 16
      %v916 = vpop.permute.xlu0 %915
      %vm949 = vcmask 162944
      %950 = vst.msk [vmem:[#allocation2] sm:$0xff] %vm949, %v854
      %951 = vst.msk [vmem:[#allocation2 + $0x8] sm:$0xff] %vm949, %v856
      %952 = vst.msk [vmem:[#allocation2 + $0x10] sm:$0xff] %vm949, %v858
      %953 = vst.msk [vmem:[#allocation2 + $0x18] sm:$0xff] %vm949, %v860
      %954 = vst.msk [vmem:[#allocation2 + $0x20] sm:$0xff] %vm949, %v862
      %955 = vst.msk [vmem:[#allocation2 + $0x28] sm:$0xff] %vm949, %v864
      %956 = vst.msk [vmem:[#allocation2 + $0x30] sm:$0xff] %vm949, %v866
      %957 = vst.msk [vmem:[#allocation2 + $0x38] sm:$0xff] %vm949, %v868
      %958 = vst.msk [vmem:[#allocation2 + $0x40] sm:$0xff] %vm949, %v870
      %959 = vst.msk [vmem:[#allocation2 + $0x48] sm:$0xff] %vm949, %v872
      %960 = vst.msk [vmem:[#allocation2 + $0x50] sm:$0xff] %vm949, %v874
      %961 = vst.msk [vmem:[#allocation2 + $0x58] sm:$0xff] %vm949, %v876
      %962 = vst.msk [vmem:[#allocation2 + $0x60] sm:$0xff] %vm949, %v878
      %963 = vst.msk [vmem:[#allocation2 + $0x68] sm:$0xff] %vm949, %v880
      %964 = vst.msk [vmem:[#allocation2 + $0x70] sm:$0xff] %vm949, %v882
      %965 = vst.msk [vmem:[#allocation2 + $0x78] sm:$0xff] %vm949, %v884
      %966 = vst.msk [vmem:[#allocation2 + $0x80] sm:$0xff] %vm949, %v886
      %967 = vst.msk [vmem:[#allocation2 + $0x88] sm:$0xff] %vm949, %v888
      %968 = vst.msk [vmem:[#allocation2 + $0x90] sm:$0xff] %vm949, %v890
      %969 = vst.msk [vmem:[#allocation2 + $0x98] sm:$0xff] %vm949, %v892
      %970 = vst.msk [vmem:[#allocation2 + $0xa0] sm:$0xff] %vm949, %v894
      %971 = vst.msk [vmem:[#allocation2 + $0xa8] sm:$0xff] %vm949, %v896
      %972 = vst.msk [vmem:[#allocation2 + $0xb0] sm:$0xff] %vm949, %v898
      %973 = vst.msk [vmem:[#allocation2 + $0xb8] sm:$0xff] %vm949, %v900
      %974 = vst.msk [vmem:[#allocation2 + $0xc0] sm:$0xff] %vm949, %v902
      %975 = vst.msk [vmem:[#allocation2 + $0xc8] sm:$0xff] %vm949, %v904
      %976 = vst.msk [vmem:[#allocation2 + $0xd0] sm:$0xff] %vm949, %v906
      %977 = vst.msk [vmem:[#allocation2 + $0xd8] sm:$0xff] %vm949, %v908
      %978 = vst.msk [vmem:[#allocation2 + $0xe0] sm:$0xff] %vm949, %v910
      %979 = vst.msk [vmem:[#allocation2 + $0xe8] sm:$0xff] %vm949, %v912
      %980 = vst.msk [vmem:[#allocation2 + $0xf0] sm:$0xff] %vm949, %v914
      %981 = vst.msk [vmem:[#allocation2 + $0xf8] sm:$0xff] %vm949, %v916
      %v982 = vld [vmem:[%s595 + $0x2] sm:$0xff]
      %v983 = vld [vmem:[%s595 + $0xa] sm:$0xff]
      %v984 = vld [vmem:[%s595 + $0x1a] sm:$0xff]
      %v985 = vld [vmem:[%s595 + $0x22] sm:$0xff]
      %v986 = vld [vmem:[%s595 + $0x32] sm:$0xff]
      %v987 = vld [vmem:[%s595 + $0x3a] sm:$0xff]
      %v988 = vld [vmem:[%s595 + $0x4a] sm:$0xff]
      %v989 = vld [vmem:[%s595 + $0x52] sm:$0xff]
      %v990 = vld [vmem:[%s595 + $0x62] sm:$0xff]
      %v991 = vld [vmem:[%s595 + $0x6a] sm:$0xff]
      %v992 = vld [vmem:[%s595 + $0x7a] sm:$0xff]
      %v993 = vld [vmem:[%s595 + $0x82] sm:$0xff]
      %v994 = vld [vmem:[%s595 + $0x92] sm:$0xff]
      %v995 = vld [vmem:[%s595 + $0x9a] sm:$0xff]
      %v996 = vld [vmem:[%s595 + $0xaa] sm:$0xff]
      %v997 = vld [vmem:[%s595 + $0xb2] sm:$0xff]
      %v998 = vld [vmem:[%s595 + $0xc2] sm:$0xff]
      %v999 = vld [vmem:[%s595 + $0xca] sm:$0xff]
      %v1000 = vld [vmem:[%s595 + $0xda] sm:$0xff]
      %v1001 = vld [vmem:[%s595 + $0xe2] sm:$0xff]
      %v1002 = vld [vmem:[%s595 + $0xf2] sm:$0xff]
      %v1003 = vld [vmem:[%s595 + $0xfa] sm:$0xff]
      %v1004 = vld [vmem:[%s595 + $0x10a] sm:$0xff]
      %v1005 = vld [vmem:[%s595 + $0x112] sm:$0xff]
      %v1006 = vld [vmem:[%s595 + $0x122] sm:$0xff]
      %v1007 = vld [vmem:[%s595 + $0x12a] sm:$0xff]
      %v1008 = vld [vmem:[%s595 + $0x13a] sm:$0xff]
      %v1009 = vld [vmem:[%s595 + $0x142] sm:$0xff]
      %v1010 = vld [vmem:[%s595 + $0x152] sm:$0xff]
      %v1011 = vld [vmem:[%s595 + $0x15a] sm:$0xff]
      %v1012 = vld [vmem:[%s595 + $0x16a] sm:$0xff]
      %v1013 = vld [vmem:[%s595 + $0x172] sm:$0xff]
      %1046 = vrot.lane.b32.xlu0 %v982, 20
      %v1047 = vpop.permute.xlu0 %1046
      %1048 = vrot.lane.b32.xlu0 %v983, 20
      %v1049 = vpop.permute.xlu0 %1048
      %1050 = vrot.lane.b32.xlu0 %v984, 20
      %v1051 = vpop.permute.xlu0 %1050
      %1052 = vrot.lane.b32.xlu0 %v985, 20
      %v1053 = vpop.permute.xlu0 %1052
      %1054 = vrot.lane.b32.xlu0 %v986, 20
      %v1055 = vpop.permute.xlu0 %1054
      %1056 = vrot.lane.b32.xlu0 %v987, 20
      %v1057 = vpop.permute.xlu0 %1056
      %1058 = vrot.lane.b32.xlu0 %v988, 20
      %v1059 = vpop.permute.xlu0 %1058
      %1060 = vrot.lane.b32.xlu0 %v989, 20
      %v1061 = vpop.permute.xlu0 %1060
      %1062 = vrot.lane.b32.xlu0 %v990, 20
      %v1063 = vpop.permute.xlu0 %1062
      %1064 = vrot.lane.b32.xlu0 %v991, 20
      %v1065 = vpop.permute.xlu0 %1064
      %1066 = vrot.lane.b32.xlu0 %v992, 20
      %v1067 = vpop.permute.xlu0 %1066
      %1068 = vrot.lane.b32.xlu0 %v993, 20
      %v1069 = vpop.permute.xlu0 %1068
      %1070 = vrot.lane.b32.xlu0 %v994, 20
      %v1071 = vpop.permute.xlu0 %1070
      %1072 = vrot.lane.b32.xlu0 %v995, 20
      %v1073 = vpop.permute.xlu0 %1072
      %1074 = vrot.lane.b32.xlu0 %v996, 20
      %v1075 = vpop.permute.xlu0 %1074
      %1076 = vrot.lane.b32.xlu0 %v997, 20
      %v1077 = vpop.permute.xlu0 %1076
      %1078 = vrot.lane.b32.xlu0 %v998, 20
      %v1079 = vpop.permute.xlu0 %1078
      %1080 = vrot.lane.b32.xlu0 %v999, 20
      %v1081 = vpop.permute.xlu0 %1080
      %1082 = vrot.lane.b32.xlu0 %v1000, 20
      %v1083 = vpop.permute.xlu0 %1082
      %1084 = vrot.lane.b32.xlu0 %v1001, 20
      %v1085 = vpop.permute.xlu0 %1084
      %1086 = vrot.lane.b32.xlu0 %v1002, 20
      %v1087 = vpop.permute.xlu0 %1086
      %1088 = vrot.lane.b32.xlu0 %v1003, 20
      %v1089 = vpop.permute.xlu0 %1088
      %1090 = vrot.lane.b32.xlu0 %v1004, 20
      %v1091 = vpop.permute.xlu0 %1090
      %1092 = vrot.lane.b32.xlu0 %v1005, 20
      %v1093 = vpop.permute.xlu0 %1092
      %1094 = vrot.lane.b32.xlu0 %v1006, 20
      %v1095 = vpop.permute.xlu0 %1094
      %1096 = vrot.lane.b32.xlu0 %v1007, 20
      %v1097 = vpop.permute.xlu0 %1096
      %1098 = vrot.lane.b32.xlu0 %v1008, 20
      %v1099 = vpop.permute.xlu0 %1098
      %1100 = vrot.lane.b32.xlu0 %v1009, 20
      %v1101 = vpop.permute.xlu0 %1100
      %1102 = vrot.lane.b32.xlu0 %v1010, 20
      %v1103 = vpop.permute.xlu0 %1102
      %1104 = vrot.lane.b32.xlu0 %v1011, 20
      %v1105 = vpop.permute.xlu0 %1104
      %1106 = vrot.lane.b32.xlu0 %v1012, 20
      %v1107 = vpop.permute.xlu0 %1106
      %1108 = vrot.lane.b32.xlu0 %v1013, 20
      %v1109 = vpop.permute.xlu0 %1108
      %vm1142 = vcmask 195744
      %1143 = vst.msk [vmem:[#allocation2] sm:$0xff] %vm1142, %v1047
      %1144 = vst.msk [vmem:[#allocation2 + $0x8] sm:$0xff] %vm1142, %v1049
      %1145 = vst.msk [vmem:[#allocation2 + $0x10] sm:$0xff] %vm1142, %v1051
      %1146 = vst.msk [vmem:[#allocation2 + $0x18] sm:$0xff] %vm1142, %v1053
      %1147 = vst.msk [vmem:[#allocation2 + $0x20] sm:$0xff] %vm1142, %v1055
      %1148 = vst.msk [vmem:[#allocation2 + $0x28] sm:$0xff] %vm1142, %v1057
      %1149 = vst.msk [vmem:[#allocation2 + $0x30] sm:$0xff] %vm1142, %v1059
      %1150 = vst.msk [vmem:[#allocation2 + $0x38] sm:$0xff] %vm1142, %v1061
      %1151 = vst.msk [vmem:[#allocation2 + $0x40] sm:$0xff] %vm1142, %v1063
      %1152 = vst.msk [vmem:[#allocation2 + $0x48] sm:$0xff] %vm1142, %v1065
      %1153 = vst.msk [vmem:[#allocation2 + $0x50] sm:$0xff] %vm1142, %v1067
      %1154 = vst.msk [vmem:[#allocation2 + $0x58] sm:$0xff] %vm1142, %v1069
      %1155 = vst.msk [vmem:[#allocation2 + $0x60] sm:$0xff] %vm1142, %v1071
      %1156 = vst.msk [vmem:[#allocation2 + $0x68] sm:$0xff] %vm1142, %v1073
      %1157 = vst.msk [vmem:[#allocation2 + $0x70] sm:$0xff] %vm1142, %v1075
      %1158 = vst.msk [vmem:[#allocation2 + $0x78] sm:$0xff] %vm1142, %v1077
      %1159 = vst.msk [vmem:[#allocation2 + $0x80] sm:$0xff] %vm1142, %v1079
      %1160 = vst.msk [vmem:[#allocation2 + $0x88] sm:$0xff] %vm1142, %v1081
      %1161 = vst.msk [vmem:[#allocation2 + $0x90] sm:$0xff] %vm1142, %v1083
      %1162 = vst.msk [vmem:[#allocation2 + $0x98] sm:$0xff] %vm1142, %v1085
      %1163 = vst.msk [vmem:[#allocation2 + $0xa0] sm:$0xff] %vm1142, %v1087
      %1164 = vst.msk [vmem:[#allocation2 + $0xa8] sm:$0xff] %vm1142, %v1089
      %1165 = vst.msk [vmem:[#allocation2 + $0xb0] sm:$0xff] %vm1142, %v1091
      %1166 = vst.msk [vmem:[#allocation2 + $0xb8] sm:$0xff] %vm1142, %v1093
      %1167 = vst.msk [vmem:[#allocation2 + $0xc0] sm:$0xff] %vm1142, %v1095
      %1168 = vst.msk [vmem:[#allocation2 + $0xc8] sm:$0xff] %vm1142, %v1097
      %1169 = vst.msk [vmem:[#allocation2 + $0xd0] sm:$0xff] %vm1142, %v1099
      %1170 = vst.msk [vmem:[#allocation2 + $0xd8] sm:$0xff] %vm1142, %v1101
      %1171 = vst.msk [vmem:[#allocation2 + $0xe0] sm:$0xff] %vm1142, %v1103
      %1172 = vst.msk [vmem:[#allocation2 + $0xe8] sm:$0xff] %vm1142, %v1105
      %1173 = vst.msk [vmem:[#allocation2 + $0xf0] sm:$0xff] %vm1142, %v1107
      %1174 = vst.msk [vmem:[#allocation2 + $0xf8] sm:$0xff] %vm1142, %v1109
      %s1175 = scalar_lea.vmem %s138, 48
      %v1176 = vld [vmem:[%s1175] sm:$0xff]
      %v1177 = vld [vmem:[%s1175 + $0x8] sm:$0xff]
      %v1178 = vld [vmem:[%s1175 + $0x18] sm:$0xff]
      %v1179 = vld [vmem:[%s1175 + $0x20] sm:$0xff]
      %v1180 = vld [vmem:[%s1175 + $0x30] sm:$0xff]
      %v1181 = vld [vmem:[%s1175 + $0x38] sm:$0xff]
      %v1182 = vld [vmem:[%s1175 + $0x48] sm:$0xff]
      %v1183 = vld [vmem:[%s1175 + $0x50] sm:$0xff]
      %v1184 = vld [vmem:[%s1175 + $0x60] sm:$0xff]
      %v1185 = vld [vmem:[%s1175 + $0x68] sm:$0xff]
      %v1186 = vld [vmem:[%s1175 + $0x78] sm:$0xff]
      %v1187 = vld [vmem:[%s1175 + $0x80] sm:$0xff]
      %v1188 = vld [vmem:[%s1175 + $0x90] sm:$0xff]
      %v1189 = vld [vmem:[%s1175 + $0x98] sm:$0xff]
      %v1190 = vld [vmem:[%s1175 + $0xa8] sm:$0xff]
      %v1191 = vld [vmem:[%s1175 + $0xb0] sm:$0xff]
      %v1192 = vld [vmem:[%s1175 + $0xc0] sm:$0xff]
      %v1193 = vld [vmem:[%s1175 + $0xc8] sm:$0xff]
      %v1194 = vld [vmem:[%s1175 + $0xd8] sm:$0xff]
      %v1195 = vld [vmem:[%s1175 + $0xe0] sm:$0xff]
      %v1196 = vld [vmem:[%s1175 + $0xf0] sm:$0xff]
      %v1197 = vld [vmem:[%s1175 + $0xf8] sm:$0xff]
      %v1198 = vld [vmem:[%s1175 + $0x108] sm:$0xff]
      %v1199 = vld [vmem:[%s1175 + $0x110] sm:$0xff]
      %v1200 = vld [vmem:[%s1175 + $0x120] sm:$0xff]
      %v1201 = vld [vmem:[%s1175 + $0x128] sm:$0xff]
      %v1202 = vld [vmem:[%s1175 + $0x138] sm:$0xff]
      %v1203 = vld [vmem:[%s1175 + $0x140] sm:$0xff]
      %v1204 = vld [vmem:[%s1175 + $0x150] sm:$0xff]
      %v1205 = vld [vmem:[%s1175 + $0x158] sm:$0xff]
      %v1206 = vld [vmem:[%s1175 + $0x168] sm:$0xff]
      %v1207 = vld [vmem:[%s1175 + $0x170] sm:$0xff]
      %1240 = vrot.lane.b32.xlu0 %v1176, 24
      %v1241 = vpop.permute.xlu0 %1240
      %1242 = vrot.lane.b32.xlu0 %v1177, 24
      %v1243 = vpop.permute.xlu0 %1242
      %1244 = vrot.lane.b32.xlu0 %v1178, 24
      %v1245 = vpop.permute.xlu0 %1244
      %1246 = vrot.lane.b32.xlu0 %v1179, 24
      %v1247 = vpop.permute.xlu0 %1246
      %1248 = vrot.lane.b32.xlu0 %v1180, 24
      %v1249 = vpop.permute.xlu0 %1248
      %1250 = vrot.lane.b32.xlu0 %v1181, 24
      %v1251 = vpop.permute.xlu0 %1250
      %1252 = vrot.lane.b32.xlu0 %v1182, 24
      %v1253 = vpop.permute.xlu0 %1252
      %1254 = vrot.lane.b32.xlu0 %v1183, 24
      %v1255 = vpop.permute.xlu0 %1254
      %1256 = vrot.lane.b32.xlu0 %v1184, 24
      %v1257 = vpop.permute.xlu0 %1256
      %1258 = vrot.lane.b32.xlu0 %v1185, 24
      %v1259 = vpop.permute.xlu0 %1258
      %1260 = vrot.lane.b32.xlu0 %v1186, 24
      %v1261 = vpop.permute.xlu0 %1260
      %1262 = vrot.lane.b32.xlu0 %v1187, 24
      %v1263 = vpop.permute.xlu0 %1262
      %1264 = vrot.lane.b32.xlu0 %v1188, 24
      %v1265 = vpop.permute.xlu0 %1264
      %1266 = vrot.lane.b32.xlu0 %v1189, 24
      %v1267 = vpop.permute.xlu0 %1266
      %1268 = vrot.lane.b32.xlu0 %v1190, 24
      %v1269 = vpop.permute.xlu0 %1268
      %1270 = vrot.lane.b32.xlu0 %v1191, 24
      %v1271 = vpop.permute.xlu0 %1270
      %1272 = vrot.lane.b32.xlu0 %v1192, 24
      %v1273 = vpop.permute.xlu0 %1272
      %1274 = vrot.lane.b32.xlu0 %v1193, 24
      %v1275 = vpop.permute.xlu0 %1274
      %1276 = vrot.lane.b32.xlu0 %v1194, 24
      %v1277 = vpop.permute.xlu0 %1276
      %1278 = vrot.lane.b32.xlu0 %v1195, 24
      %v1279 = vpop.permute.xlu0 %1278
      %1280 = vrot.lane.b32.xlu0 %v1196, 24
      %v1281 = vpop.permute.xlu0 %1280
      %1282 = vrot.lane.b32.xlu0 %v1197, 24
      %v1283 = vpop.permute.xlu0 %1282
      %1284 = vrot.lane.b32.xlu0 %v1198, 24
      %v1285 = vpop.permute.xlu0 %1284
      %1286 = vrot.lane.b32.xlu0 %v1199, 24
      %v1287 = vpop.permute.xlu0 %1286
      %1288 = vrot.lane.b32.xlu0 %v1200, 24
      %v1289 = vpop.permute.xlu0 %1288
      %1290 = vrot.lane.b32.xlu0 %v1201, 24
      %v1291 = vpop.permute.xlu0 %1290
      %1292 = vrot.lane.b32.xlu0 %v1202, 24
      %v1293 = vpop.permute.xlu0 %1292
      %1294 = vrot.lane.b32.xlu0 %v1203, 24
      %v1295 = vpop.permute.xlu0 %1294
      %1296 = vrot.lane.b32.xlu0 %v1204, 24
      %v1297 = vpop.permute.xlu0 %1296
      %1298 = vrot.lane.b32.xlu0 %v1205, 24
      %v1299 = vpop.permute.xlu0 %1298
      %1300 = vrot.lane.b32.xlu0 %v1206, 24
      %v1301 = vpop.permute.xlu0 %1300
      %1302 = vrot.lane.b32.xlu0 %v1207, 24
      %v1303 = vpop.permute.xlu0 %1302
      %vm1336 = vcmask 228544
      %1337 = vst.msk [vmem:[#allocation2] sm:$0xff] %vm1336, %v1241
      %1338 = vst.msk [vmem:[#allocation2 + $0x8] sm:$0xff] %vm1336, %v1243
      %1339 = vst.msk [vmem:[#allocation2 + $0x10] sm:$0xff] %vm1336, %v1245
      %1340 = vst.msk [vmem:[#allocation2 + $0x18] sm:$0xff] %vm1336, %v1247
      %1341 = vst.msk [vmem:[#allocation2 + $0x20] sm:$0xff] %vm1336, %v1249
      %1342 = vst.msk [vmem:[#allocation2 + $0x28] sm:$0xff] %vm1336, %v1251
      %1343 = vst.msk [vmem:[#allocation2 + $0x30] sm:$0xff] %vm1336, %v1253
      %1344 = vst.msk [vmem:[#allocation2 + $0x38] sm:$0xff] %vm1336, %v1255
      %1345 = vst.msk [vmem:[#allocation2 + $0x40] sm:$0xff] %vm1336, %v1257
      %1346 = vst.msk [vmem:[#allocation2 + $0x48] sm:$0xff] %vm1336, %v1259
      %1347 = vst.msk [vmem:[#allocation2 + $0x50] sm:$0xff] %vm1336, %v1261
      %1348 = vst.msk [vmem:[#allocation2 + $0x58] sm:$0xff] %vm1336, %v1263
      %1349 = vst.msk [vmem:[#allocation2 + $0x60] sm:$0xff] %vm1336, %v1265
      %1350 = vst.msk [vmem:[#allocation2 + $0x68] sm:$0xff] %vm1336, %v1267
      %1351 = vst.msk [vmem:[#allocation2 + $0x70] sm:$0xff] %vm1336, %v1269
      %1352 = vst.msk [vmem:[#allocation2 + $0x78] sm:$0xff] %vm1336, %v1271
      %1353 = vst.msk [vmem:[#allocation2 + $0x80] sm:$0xff] %vm1336, %v1273
      %1354 = vst.msk [vmem:[#allocation2 + $0x88] sm:$0xff] %vm1336, %v1275
      %1355 = vst.msk [vmem:[#allocation2 + $0x90] sm:$0xff] %vm1336, %v1277
      %1356 = vst.msk [vmem:[#allocation2 + $0x98] sm:$0xff] %vm1336, %v1279
      %1357 = vst.msk [vmem:[#allocation2 + $0xa0] sm:$0xff] %vm1336, %v1281
      %1358 = vst.msk [vmem:[#allocation2 + $0xa8] sm:$0xff] %vm1336, %v1283
      %1359 = vst.msk [vmem:[#allocation2 + $0xb0] sm:$0xff] %vm1336, %v1285
      %1360 = vst.msk [vmem:[#allocation2 + $0xb8] sm:$0xff] %vm1336, %v1287
      %1361 = vst.msk [vmem:[#allocation2 + $0xc0] sm:$0xff] %vm1336, %v1289
      %1362 = vst.msk [vmem:[#allocation2 + $0xc8] sm:$0xff] %vm1336, %v1291
      %1363 = vst.msk [vmem:[#allocation2 + $0xd0] sm:$0xff] %vm1336, %v1293
      %1364 = vst.msk [vmem:[#allocation2 + $0xd8] sm:$0xff] %vm1336, %v1295
      %1365 = vst.msk [vmem:[#allocation2 + $0xe0] sm:$0xff] %vm1336, %v1297
      %1366 = vst.msk [vmem:[#allocation2 + $0xe8] sm:$0xff] %vm1336, %v1299
      %1367 = vst.msk [vmem:[#allocation2 + $0xf0] sm:$0xff] %vm1336, %v1301
      %1368 = vst.msk [vmem:[#allocation2 + $0xf8] sm:$0xff] %vm1336, %v1303
      %v1369 = vld [vmem:[%s1175 + $0x1] sm:$0xff]
      %v1370 = vld [vmem:[%s1175 + $0x9] sm:$0xff]
      %v1371 = vld [vmem:[%s1175 + $0x19] sm:$0xff]
      %v1372 = vld [vmem:[%s1175 + $0x21] sm:$0xff]
      %v1373 = vld [vmem:[%s1175 + $0x31] sm:$0xff]
      %v1374 = vld [vmem:[%s1175 + $0x39] sm:$0xff]
      %v1375 = vld [vmem:[%s1175 + $0x49] sm:$0xff]
      %v1376 = vld [vmem:[%s1175 + $0x51] sm:$0xff]
      %v1377 = vld [vmem:[%s1175 + $0x61] sm:$0xff]
      %v1378 = vld [vmem:[%s1175 + $0x69] sm:$0xff]
      %v1379 = vld [vmem:[%s1175 + $0x79] sm:$0xff]
      %v1380 = vld [vmem:[%s1175 + $0x81] sm:$0xff]
      %v1381 = vld [vmem:[%s1175 + $0x91] sm:$0xff]
      %v1382 = vld [vmem:[%s1175 + $0x99] sm:$0xff]
      %v1383 = vld [vmem:[%s1175 + $0xa9] sm:$0xff]
      %v1384 = vld [vmem:[%s1175 + $0xb1] sm:$0xff]
      %v1385 = vld [vmem:[%s1175 + $0xc1] sm:$0xff]
      %v1386 = vld [vmem:[%s1175 + $0xc9] sm:$0xff]
      %v1387 = vld [vmem:[%s1175 + $0xd9] sm:$0xff]
      %v1388 = vld [vmem:[%s1175 + $0xe1] sm:$0xff]
      %v1389 = vld [vmem:[%s1175 + $0xf1] sm:$0xff]
      %v1390 = vld [vmem:[%s1175 + $0xf9] sm:$0xff]
      %v1391 = vld [vmem:[%s1175 + $0x109] sm:$0xff]
      %v1392 = vld [vmem:[%s1175 + $0x111] sm:$0xff]
      %v1393 = vld [vmem:[%s1175 + $0x121] sm:$0xff]
      %v1394 = vld [vmem:[%s1175 + $0x129] sm:$0xff]
      %v1395 = vld [vmem:[%s1175 + $0x139] sm:$0xff]
      %v1396 = vld [vmem:[%s1175 + $0x141] sm:$0xff]
      %v1397 = vld [vmem:[%s1175 + $0x151] sm:$0xff]
      %v1398 = vld [vmem:[%s1175 + $0x159] sm:$0xff]
      %v1399 = vld [vmem:[%s1175 + $0x169] sm:$0xff]
      %v1400 = vld [vmem:[%s1175 + $0x171] sm:$0xff]
      %1433 = vrot.lane.b32.xlu0 %v1369, 28
      %v1434 = vpop.permute.xlu0 %1433
      %1435 = vrot.lane.b32.xlu0 %v1370, 28
      %v1436 = vpop.permute.xlu0 %1435
      %1437 = vrot.lane.b32.xlu0 %v1371, 28
      %v1438 = vpop.permute.xlu0 %1437
      %1439 = vrot.lane.b32.xlu0 %v1372, 28
      %v1440 = vpop.permute.xlu0 %1439
      %1441 = vrot.lane.b32.xlu0 %v1373, 28
      %v1442 = vpop.permute.xlu0 %1441
      %1443 = vrot.lane.b32.xlu0 %v1374, 28
      %v1444 = vpop.permute.xlu0 %1443
      %1445 = vrot.lane.b32.xlu0 %v1375, 28
      %v1446 = vpop.permute.xlu0 %1445
      %1447 = vrot.lane.b32.xlu0 %v1376, 28
      %v1448 = vpop.permute.xlu0 %1447
      %1449 = vrot.lane.b32.xlu0 %v1377, 28
      %v1450 = vpop.permute.xlu0 %1449
      %1451 = vrot.lane.b32.xlu0 %v1378, 28
      %v1452 = vpop.permute.xlu0 %1451
      %1453 = vrot.lane.b32.xlu0 %v1379, 28
      %v1454 = vpop.permute.xlu0 %1453
      %1455 = vrot.lane.b32.xlu0 %v1380, 28
      %v1456 = vpop.permute.xlu0 %1455
      %1457 = vrot.lane.b32.xlu0 %v1381, 28
      %v1458 = vpop.permute.xlu0 %1457
      %1459 = vrot.lane.b32.xlu0 %v1382, 28
      %v1460 = vpop.permute.xlu0 %1459
      %1461 = vrot.lane.b32.xlu0 %v1383, 28
      %v1462 = vpop.permute.xlu0 %1461
      %1463 = vrot.lane.b32.xlu0 %v1384, 28
      %v1464 = vpop.permute.xlu0 %1463
      %1465 = vrot.lane.b32.xlu0 %v1385, 28
      %v1466 = vpop.permute.xlu0 %1465
      %1467 = vrot.lane.b32.xlu0 %v1386, 28
      %v1468 = vpop.permute.xlu0 %1467
      %1469 = vrot.lane.b32.xlu0 %v1387, 28
      %v1470 = vpop.permute.xlu0 %1469
      %1471 = vrot.lane.b32.xlu0 %v1388, 28
      %v1472 = vpop.permute.xlu0 %1471
      %1473 = vrot.lane.b32.xlu0 %v1389, 28
      %v1474 = vpop.permute.xlu0 %1473
      %1475 = vrot.lane.b32.xlu0 %v1390, 28
      %v1476 = vpop.permute.xlu0 %1475
      %1477 = vrot.lane.b32.xlu0 %v1391, 28
      %v1478 = vpop.permute.xlu0 %1477
      %1479 = vrot.lane.b32.xlu0 %v1392, 28
      %v1480 = vpop.permute.xlu0 %1479
      %1481 = vrot.lane.b32.xlu0 %v1393, 28
      %v1482 = vpop.permute.xlu0 %1481
      %1483 = vrot.lane.b32.xlu0 %v1394, 28
      %v1484 = vpop.permute.xlu0 %1483
      %1485 = vrot.lane.b32.xlu0 %v1395, 28
      %v1486 = vpop.permute.xlu0 %1485
      %1487 = vrot.lane.b32.xlu0 %v1396, 28
      %v1488 = vpop.permute.xlu0 %1487
      %1489 = vrot.lane.b32.xlu0 %v1397, 28
      %v1490 = vpop.permute.xlu0 %1489
      %1491 = vrot.lane.b32.xlu0 %v1398, 28
      %v1492 = vpop.permute.xlu0 %1491
      %1493 = vrot.lane.b32.xlu0 %v1399, 28
      %v1494 = vpop.permute.xlu0 %1493
      %1495 = vrot.lane.b32.xlu0 %v1400, 28
      %v1496 = vpop.permute.xlu0 %1495
      %vm1529 = vcmask 261344
      %1530 = vst.msk [vmem:[#allocation2] sm:$0xff] %vm1529, %v1434
      %1531 = vst.msk [vmem:[#allocation2 + $0x8] sm:$0xff] %vm1529, %v1436
      %1532 = vst.msk [vmem:[#allocation2 + $0x10] sm:$0xff] %vm1529, %v1438
      %1533 = vst.msk [vmem:[#allocation2 + $0x18] sm:$0xff] %vm1529, %v1440
      %1534 = vst.msk [vmem:[#allocation2 + $0x20] sm:$0xff] %vm1529, %v1442
      %1535 = vst.msk [vmem:[#allocation2 + $0x28] sm:$0xff] %vm1529, %v1444
      %1536 = vst.msk [vmem:[#allocation2 + $0x30] sm:$0xff] %vm1529, %v1446
      %1537 = vst.msk [vmem:[#allocation2 + $0x38] sm:$0xff] %vm1529, %v1448
      %1538 = vst.msk [vmem:[#allocation2 + $0x40] sm:$0xff] %vm1529, %v1450
      %1539 = vst.msk [vmem:[#allocation2 + $0x48] sm:$0xff] %vm1529, %v1452
      %1540 = vst.msk [vmem:[#allocation2 + $0x50] sm:$0xff] %vm1529, %v1454
      %1541 = vst.msk [vmem:[#allocation2 + $0x58] sm:$0xff] %vm1529, %v1456
      %1542 = vst.msk [vmem:[#allocation2 + $0x60] sm:$0xff] %vm1529, %v1458
      %1543 = vst.msk [vmem:[#allocation2 + $0x68] sm:$0xff] %vm1529, %v1460
      %1544 = vst.msk [vmem:[#allocation2 + $0x70] sm:$0xff] %vm1529, %v1462
      %1545 = vst.msk [vmem:[#allocation2 + $0x78] sm:$0xff] %vm1529, %v1464
      %1546 = vst.msk [vmem:[#allocation2 + $0x80] sm:$0xff] %vm1529, %v1466
      %1547 = vst.msk [vmem:[#allocation2 + $0x88] sm:$0xff] %vm1529, %v1468
      %1548 = vst.msk [vmem:[#allocation2 + $0x90] sm:$0xff] %vm1529, %v1470
      %1549 = vst.msk [vmem:[#allocation2 + $0x98] sm:$0xff] %vm1529, %v1472
      %1550 = vst.msk [vmem:[#allocation2 + $0xa0] sm:$0xff] %vm1529, %v1474
      %1551 = vst.msk [vmem:[#allocation2 + $0xa8] sm:$0xff] %vm1529, %v1476
      %1552 = vst.msk [vmem:[#allocation2 + $0xb0] sm:$0xff] %vm1529, %v1478
      %1553 = vst.msk [vmem:[#allocation2 + $0xb8] sm:$0xff] %vm1529, %v1480
      %1554 = vst.msk [vmem:[#allocation2 + $0xc0] sm:$0xff] %vm1529, %v1482
      %1555 = vst.msk [vmem:[#allocation2 + $0xc8] sm:$0xff] %vm1529, %v1484
      %1556 = vst.msk [vmem:[#allocation2 + $0xd0] sm:$0xff] %vm1529, %v1486
      %1557 = vst.msk [vmem:[#allocation2 + $0xd8] sm:$0xff] %vm1529, %v1488
      %1558 = vst.msk [vmem:[#allocation2 + $0xe0] sm:$0xff] %vm1529, %v1490
      %1559 = vst.msk [vmem:[#allocation2 + $0xe8] sm:$0xff] %vm1529, %v1492
      %1560 = vst.msk [vmem:[#allocation2 + $0xf0] sm:$0xff] %vm1529, %v1494
      %1561 = vst.msk [vmem:[#allocation2 + $0xf8] sm:$0xff] %vm1529, %v1496
      %v1562 = vld [vmem:[%s1175 + $0x2] sm:$0xff]
      %v1563 = vld [vmem:[%s1175 + $0xa] sm:$0xff]
      %v1564 = vld [vmem:[%s1175 + $0x1a] sm:$0xff]
      %v1565 = vld [vmem:[%s1175 + $0x22] sm:$0xff]
      %v1566 = vld [vmem:[%s1175 + $0x32] sm:$0xff]
      %v1567 = vld [vmem:[%s1175 + $0x3a] sm:$0xff]
      %v1568 = vld [vmem:[%s1175 + $0x4a] sm:$0xff]
      %v1569 = vld [vmem:[%s1175 + $0x52] sm:$0xff]
      %v1570 = vld [vmem:[%s1175 + $0x62] sm:$0xff]
      %v1571 = vld [vmem:[%s1175 + $0x6a] sm:$0xff]
      %v1572 = vld [vmem:[%s1175 + $0x7a] sm:$0xff]
      %v1573 = vld [vmem:[%s1175 + $0x82] sm:$0xff]
      %v1574 = vld [vmem:[%s1175 + $0x92] sm:$0xff]
      %v1575 = vld [vmem:[%s1175 + $0x9a] sm:$0xff]
      %v1576 = vld [vmem:[%s1175 + $0xaa] sm:$0xff]
      %v1577 = vld [vmem:[%s1175 + $0xb2] sm:$0xff]
      %v1578 = vld [vmem:[%s1175 + $0xc2] sm:$0xff]
      %v1579 = vld [vmem:[%s1175 + $0xca] sm:$0xff]
      %v1580 = vld [vmem:[%s1175 + $0xda] sm:$0xff]
      %v1581 = vld [vmem:[%s1175 + $0xe2] sm:$0xff]
      %v1582 = vld [vmem:[%s1175 + $0xf2] sm:$0xff]
      %v1583 = vld [vmem:[%s1175 + $0xfa] sm:$0xff]
      %v1584 = vld [vmem:[%s1175 + $0x10a] sm:$0xff]
      %v1585 = vld [vmem:[%s1175 + $0x112] sm:$0xff]
      %v1586 = vld [vmem:[%s1175 + $0x122] sm:$0xff]
      %v1587 = vld [vmem:[%s1175 + $0x12a] sm:$0xff]
      %v1588 = vld [vmem:[%s1175 + $0x13a] sm:$0xff]
      %v1589 = vld [vmem:[%s1175 + $0x142] sm:$0xff]
      %v1590 = vld [vmem:[%s1175 + $0x152] sm:$0xff]
      %v1591 = vld [vmem:[%s1175 + $0x15a] sm:$0xff]
      %v1592 = vld [vmem:[%s1175 + $0x16a] sm:$0xff]
      %v1593 = vld [vmem:[%s1175 + $0x172] sm:$0xff]
      %1626 = vrot.lane.b32.xlu0 %v1562, 32
      %v1627 = vpop.permute.xlu0 %1626
      %1628 = vrot.lane.b32.xlu0 %v1563, 32
      %v1629 = vpop.permute.xlu0 %1628
      %1630 = vrot.lane.b32.xlu0 %v1564, 32
      %v1631 = vpop.permute.xlu0 %1630
      %1632 = vrot.lane.b32.xlu0 %v1565, 32
      %v1633 = vpop.permute.xlu0 %1632
      %1634 = vrot.lane.b32.xlu0 %v1566, 32
      %v1635 = vpop.permute.xlu0 %1634
      %1636 = vrot.lane.b32.xlu0 %v1567, 32
      %v1637 = vpop.permute.xlu0 %1636
      %1638 = vrot.lane.b32.xlu0 %v1568, 32
      %v1639 = vpop.permute.xlu0 %1638
      %1640 = vrot.lane.b32.xlu0 %v1569, 32
      %v1641 = vpop.permute.xlu0 %1640
      %1642 = vrot.lane.b32.xlu0 %v1570, 32
      %v1643 = vpop.permute.xlu0 %1642
      %1644 = vrot.lane.b32.xlu0 %v1571, 32
      %v1645 = vpop.permute.xlu0 %1644
      %1646 = vrot.lane.b32.xlu0 %v1572, 32
      %v1647 = vpop.permute.xlu0 %1646
      %1648 = vrot.lane.b32.xlu0 %v1573, 32
      %v1649 = vpop.permute.xlu0 %1648
      %1650 = vrot.lane.b32.xlu0 %v1574, 32
      %v1651 = vpop.permute.xlu0 %1650
      %1652 = vrot.lane.b32.xlu0 %v1575, 32
      %v1653 = vpop.permute.xlu0 %1652
      %1654 = vrot.lane.b32.xlu0 %v1576, 32
      %v1655 = vpop.permute.xlu0 %1654
      %1656 = vrot.lane.b32.xlu0 %v1577, 32
      %v1657 = vpop.permute.xlu0 %1656
      %1658 = vrot.lane.b32.xlu0 %v1578, 32
      %v1659 = vpop.permute.xlu0 %1658
      %1660 = vrot.lane.b32.xlu0 %v1579, 32
      %v1661 = vpop.permute.xlu0 %1660
      %1662 = vrot.lane.b32.xlu0 %v1580, 32
      %v1663 = vpop.permute.xlu0 %1662
      %1664 = vrot.lane.b32.xlu0 %v1581, 32
      %v1665 = vpop.permute.xlu0 %1664
      %1666 = vrot.lane.b32.xlu0 %v1582, 32
      %v1667 = vpop.permute.xlu0 %1666
      %1668 = vrot.lane.b32.xlu0 %v1583, 32
      %v1669 = vpop.permute.xlu0 %1668
      %1670 = vrot.lane.b32.xlu0 %v1584, 32
      %v1671 = vpop.permute.xlu0 %1670
      %1672 = vrot.lane.b32.xlu0 %v1585, 32
      %v1673 = vpop.permute.xlu0 %1672
      %1674 = vrot.lane.b32.xlu0 %v1586, 32
      %v1675 = vpop.permute.xlu0 %1674
      %1676 = vrot.lane.b32.xlu0 %v1587, 32
      %v1677 = vpop.permute.xlu0 %1676
      %1678 = vrot.lane.b32.xlu0 %v1588, 32
      %v1679 = vpop.permute.xlu0 %1678
      %1680 = vrot.lane.b32.xlu0 %v1589, 32
      %v1681 = vpop.permute.xlu0 %1680
      %1682 = vrot.lane.b32.xlu0 %v1590, 32
      %v1683 = vpop.permute.xlu0 %1682
      %1684 = vrot.lane.b32.xlu0 %v1591, 32
      %v1685 = vpop.permute.xlu0 %1684
      %1686 = vrot.lane.b32.xlu0 %v1592, 32
      %v1687 = vpop.permute.xlu0 %1686
      %1688 = vrot.lane.b32.xlu0 %v1593, 32
      %v1689 = vpop.permute.xlu0 %1688
      %vm1722 = vcmask 294144
      %1723 = vst.msk [vmem:[#allocation2] sm:$0xff] %vm1722, %v1627
      %1724 = vst.msk [vmem:[#allocation2 + $0x8] sm:$0xff] %vm1722, %v1629
      %1725 = vst.msk [vmem:[#allocation2 + $0x10] sm:$0xff] %vm1722, %v1631
      %1726 = vst.msk [vmem:[#allocation2 + $0x18] sm:$0xff] %vm1722, %v1633
      %1727 = vst.msk [vmem:[#allocation2 + $0x20] sm:$0xff] %vm1722, %v1635
      %1728 = vst.msk [vmem:[#allocation2 + $0x28] sm:$0xff] %vm1722, %v1637
      %1729 = vst.msk [vmem:[#allocation2 + $0x30] sm:$0xff] %vm1722, %v1639
      %1730 = vst.msk [vmem:[#allocation2 + $0x38] sm:$0xff] %vm1722, %v1641
      %1731 = vst.msk [vmem:[#allocation2 + $0x40] sm:$0xff] %vm1722, %v1643
      %1732 = vst.msk [vmem:[#allocation2 + $0x48] sm:$0xff] %vm1722, %v1645
      %1733 = vst.msk [vmem:[#allocation2 + $0x50] sm:$0xff] %vm1722, %v1647
      %1734 = vst.msk [vmem:[#allocation2 + $0x58] sm:$0xff] %vm1722, %v1649
      %1735 = vst.msk [vmem:[#allocation2 + $0x60] sm:$0xff] %vm1722, %v1651
      %1736 = vst.msk [vmem:[#allocation2 + $0x68] sm:$0xff] %vm1722, %v1653
      %1737 = vst.msk [vmem:[#allocation2 + $0x70] sm:$0xff] %vm1722, %v1655
      %1738 = vst.msk [vmem:[#allocation2 + $0x78] sm:$0xff] %vm1722, %v1657
      %1739 = vst.msk [vmem:[#allocation2 + $0x80] sm:$0xff] %vm1722, %v1659
      %1740 = vst.msk [vmem:[#allocation2 + $0x88] sm:$0xff] %vm1722, %v1661
      %1741 = vst.msk [vmem:[#allocation2 + $0x90] sm:$0xff] %vm1722, %v1663
      %1742 = vst.msk [vmem:[#allocation2 + $0x98] sm:$0xff] %vm1722, %v1665
      %1743 = vst.msk [vmem:[#allocation2 + $0xa0] sm:$0xff] %vm1722, %v1667
      %1744 = vst.msk [vmem:[#allocation2 + $0xa8] sm:$0xff] %vm1722, %v1669
      %1745 = vst.msk [vmem:[#allocation2 + $0xb0] sm:$0xff] %vm1722, %v1671
      %1746 = vst.msk [vmem:[#allocation2 + $0xb8] sm:$0xff] %vm1722, %v1673
      %1747 = vst.msk [vmem:[#allocation2 + $0xc0] sm:$0xff] %vm1722, %v1675
      %1748 = vst.msk [vmem:[#allocation2 + $0xc8] sm:$0xff] %vm1722, %v1677
      %1749 = vst.msk [vmem:[#allocation2 + $0xd0] sm:$0xff] %vm1722, %v1679
      %1750 = vst.msk [vmem:[#allocation2 + $0xd8] sm:$0xff] %vm1722, %v1681
      %1751 = vst.msk [vmem:[#allocation2 + $0xe0] sm:$0xff] %vm1722, %v1683
      %1752 = vst.msk [vmem:[#allocation2 + $0xe8] sm:$0xff] %vm1722, %v1685
      %1753 = vst.msk [vmem:[#allocation2 + $0xf0] sm:$0xff] %vm1722, %v1687
      %1754 = vst.msk [vmem:[#allocation2 + $0xf8] sm:$0xff] %vm1722, %v1689
      %v1755 = vld [vmem:[#allocation2] sm:$0xff]
      %v1756 = vld [vmem:[#allocation2 + $0x8] sm:$0xff]
      %v1757 = vld [vmem:[#allocation2 + $0x10] sm:$0xff]
      %v1758 = vld [vmem:[#allocation2 + $0x18] sm:$0xff]
      %v1759 = vld [vmem:[#allocation2 + $0x20] sm:$0xff]
      %v1760 = vld [vmem:[#allocation2 + $0x28] sm:$0xff]
      %v1761 = vld [vmem:[#allocation2 + $0x30] sm:$0xff]
      %v1762 = vld [vmem:[#allocation2 + $0x38] sm:$0xff]
      %v1763 = vld [vmem:[#allocation2 + $0x40] sm:$0xff]
      %v1764 = vld [vmem:[#allocation2 + $0x48] sm:$0xff]
      %v1765 = vld [vmem:[#allocation2 + $0x50] sm:$0xff]
      %v1766 = vld [vmem:[#allocation2 + $0x58] sm:$0xff]
      %v1767 = vld [vmem:[#allocation2 + $0x60] sm:$0xff]
      %v1768 = vld [vmem:[#allocation2 + $0x68] sm:$0xff]
      %v1769 = vld [vmem:[#allocation2 + $0x70] sm:$0xff]
      %v1770 = vld [vmem:[#allocation2 + $0x78] sm:$0xff]
      %v1771 = vld [vmem:[#allocation2 + $0x80] sm:$0xff]
      %v1772 = vld [vmem:[#allocation2 + $0x88] sm:$0xff]
      %v1773 = vld [vmem:[#allocation2 + $0x90] sm:$0xff]
      %v1774 = vld [vmem:[#allocation2 + $0x98] sm:$0xff]
      %v1775 = vld [vmem:[#allocation2 + $0xa0] sm:$0xff]
      %v1776 = vld [vmem:[#allocation2 + $0xa8] sm:$0xff]
      %v1777 = vld [vmem:[#allocation2 + $0xb0] sm:$0xff]
      %v1778 = vld [vmem:[#allocation2 + $0xb8] sm:$0xff]
      %v1779 = vld [vmem:[#allocation2 + $0xc0] sm:$0xff]
      %v1780 = vld [vmem:[#allocation2 + $0xc8] sm:$0xff]
      %v1781 = vld [vmem:[#allocation2 + $0xd0] sm:$0xff]
      %v1782 = vld [vmem:[#allocation2 + $0xd8] sm:$0xff]
      %v1783 = vld [vmem:[#allocation2 + $0xe0] sm:$0xff]
      %v1784 = vld [vmem:[#allocation2 + $0xe8] sm:$0xff]
      %v1785 = vld [vmem:[#allocation2 + $0xf0] sm:$0xff]
      %v1786 = vld [vmem:[#allocation2 + $0xf8] sm:$0xff]
      %v1787 = vld [vmem:[%s1] sm:$0xff]
      %v1788 = vld [vmem:[%s1 + $0x8] sm:$0xff]
      %v1789 = vld [vmem:[%s1 + $0x10] sm:$0xff]
      %v1790 = vld [vmem:[%s1 + $0x18] sm:$0xff]
      %v1791 = vld [vmem:[%s1 + $0x20] sm:$0xf]
      %vm1792 = vcmask 293888
      %v1794 = vsel %vm1792, %v1755, 0
      %v1797 = vsel %vm1792, %v1756, 0
      %v1800 = vsel %vm1792, %v1757, 0
      %v1803 = vsel %vm1792, %v1758, 0
      %v1806 = vsel %vm1792, %v1759, 0
      %v1809 = vsel %vm1792, %v1760, 0
      %v1812 = vsel %vm1792, %v1761, 0
      %v1815 = vsel %vm1792, %v1762, 0
      %v1818 = vsel %vm1792, %v1763, 0
      %v1821 = vsel %vm1792, %v1764, 0
      %v1824 = vsel %vm1792, %v1765, 0
      %v1827 = vsel %vm1792, %v1766, 0
      %v1830 = vsel %vm1792, %v1767, 0
      %v1833 = vsel %vm1792, %v1768, 0
      %v1836 = vsel %vm1792, %v1769, 0
      %v1839 = vsel %vm1792, %v1770, 0
      %v1842 = vsel %vm1792, %v1771, 0
      %v1845 = vsel %vm1792, %v1772, 0
      %v1848 = vsel %vm1792, %v1773, 0
      %v1851 = vsel %vm1792, %v1774, 0
      %v1854 = vsel %vm1792, %v1775, 0
      %v1857 = vsel %vm1792, %v1776, 0
      %v1860 = vsel %vm1792, %v1777, 0
      %v1863 = vsel %vm1792, %v1778, 0
      %v1866 = vsel %vm1792, %v1779, 0
      %v1869 = vsel %vm1792, %v1780, 0
      %v1872 = vsel %vm1792, %v1781, 0
      %v1875 = vsel %vm1792, %v1782, 0
      %v1878 = vsel %vm1792, %v1783, 0
      %v1881 = vsel %vm1792, %v1784, 0
      %v1884 = vsel %vm1792, %v1785, 0
      %v1887 = vsel %vm1792, %v1786, 0
      %vm1889 = vcmask 1043456
      %v1891 = vsel %vm1889, %v1791, 0
      %1893 = vmatprep.subr.mxu0 0.0
      %1894 = vmatpush1.msra.mxu0 %v1787
      %1895 = vmatprep.subr.mxu0 0.0
      %1896 = vmatpush1.msra.mxu0 %v1788
      %1897 = vmatprep.subr.mxu0 0.0
      %1898 = vmatpush1.msra.mxu0 %v1789
      %1899 = vmatprep.subr.mxu0 0.0
      %1900 = vmatpush1.msra.mxu0 %v1790
      %1901 = vmatprep.subr.mxu0 0.0
      %1902 = vmatpush1.msra.mxu0 %v1891
      %1903 = vmatprep.subr.mxu0 0.0
      %1904 = vmatpush1.msra.mxu0 0.0
      %1905 = vmatprep.subr.mxu0 0.0
      %1906 = vmatpush1.msra.mxu0 0.0
      %1907 = vmatprep.subr.mxu0 0.0
      %1908 = vmatpush1.msra.mxu0 0.0
      %1909 = vmatprep.subr.mxu0 0.0
      %1910 = vmatpush1.msra.mxu0 0.0
      %1911 = vmatprep.subr.mxu0 0.0
      %1912 = vmatpush1.msra.mxu0 0.0
      %1913 = vmatprep.subr.mxu0 0.0
      %1914 = vmatpush1.msra.mxu0 0.0
      %1915 = vmatprep.subr.mxu0 0.0
      %1916 = vmatpush1.msra.mxu0 0.0
      %1917 = vmatprep.subr.mxu0 0.0
      %1918 = vmatpush1.msra.mxu0 0.0
      %1919 = vmatprep.subr.mxu0 0.0
      %1920 = vmatpush1.msra.mxu0 0.0
      %1921 = vmatprep.subr.mxu0 0.0
      %1922 = vmatpush1.msra.mxu0 0.0
      %1923 = vmatprep.subr.mxu0 0.0
      %1924 = vmatpush1.msra.mxu0 0.0
      %1925 = vmatprep.subr.mxu0 0.0
      %1926 = vmatpush1.msra.mxu0 0.0
      %1927 = vmatprep.subr.mxu0 0.0
      %1928 = vmatpush1.msra.mxu0 0.0
      %1929 = vmatprep.subr.mxu0 0.0
      %1930 = vmatpush1.msra.mxu0 0.0
      %1931 = vmatprep.subr.mxu0 0.0
      %1932 = vmatpush1.msra.mxu0 0.0
      %1933 = vmatprep.subr.mxu0 0.0
      %1934 = vmatpush1.msra.mxu0 0.0
      %1935 = vmatprep.subr.mxu0 0.0
      %1936 = vmatpush1.msra.mxu0 0.0
      %1937 = vmatprep.subr.mxu0 0.0
      %1938 = vmatpush1.msra.mxu0 0.0
      %1939 = vmatprep.subr.mxu0 0.0
      %1940 = vmatpush1.msra.mxu0 0.0
      %1941 = vmatprep.subr.mxu0 0.0
      %1942 = vmatpush1.msra.mxu0 0.0
      %1943 = vmatprep.subr.mxu0 0.0
      %1944 = vmatpush1.msra.mxu0 0.0
      %1945 = vmatprep.subr.mxu0 0.0
      %1946 = vmatpush1.msra.mxu0 0.0
      %1947 = vmatprep.subr.mxu0 0.0
      %1948 = vmatpush1.msra.mxu0 0.0
      %1949 = vmatprep.subr.mxu0 0.0
      %1950 = vmatpush1.msra.mxu0 0.0
      %1951 = vmatprep.subr.mxu0 0.0
      %1952 = vmatpush1.msra.mxu0 0.0
      %1953 = vmatprep.subr.mxu0 0.0
      %1954 = vmatpush1.msra.mxu0 0.0
      %1955 = vmatprep.subr.mxu0 0.0
      %1956 = vmatpush1.msra.mxu0 0.0
      %1957 = vmatprep.mubr.f32.mxu0 0.0
      %1958 = vmatmul.mubr.f32.gmra.mrb[0].mxu0 %v1794
      %v1959 = vpop.f32.mrb[0].mxu0
      %v1960 = vadd.f32 0.0, %v1959
      %v1961 = vpop.f32.mrb[0].mxu0
      %1962 = vmatprep.mubr.f32.mxu0 0.0
      %1963 = vmatmul.mubr.f32.gmra.mrb[0].mxu0 %v1797
      %v1964 = vpop.f32.mrb[0].mxu0
      %v1965 = vadd.f32 0.0, %v1964
      %v1966 = vpop.f32.mrb[0].mxu0
      %1967 = vmatprep.mubr.f32.mxu0 0.0
      %1968 = vmatmul.mubr.f32.gmra.mrb[0].mxu0 %v1800
      %v1969 = vpop.f32.mrb[0].mxu0
      %v1970 = vadd.f32 0.0, %v1969
      %v1971 = vpop.f32.mrb[0].mxu0
      %1972 = vmatprep.mubr.f32.mxu0 0.0
      %1973 = vmatmul.mubr.f32.gmra.mrb[0].mxu0 %v1803
      %v1974 = vpop.f32.mrb[0].mxu0
      %v1975 = vadd.f32 0.0, %v1974
      %v1976 = vpop.f32.mrb[0].mxu0
      %1977 = vmatprep.mubr.f32.mxu0 0.0
      %1978 = vmatmul.mubr.f32.gmra.mrb[0].mxu0 %v1806
      %v1979 = vpop.f32.mrb[0].mxu0
      %v1980 = vadd.f32 0.0, %v1979
      %v1981 = vpop.f32.mrb[0].mxu0
      %1982 = vmatprep.mubr.f32.mxu0 0.0
      %1983 = vmatmul.mubr.f32.gmra.mrb[0].mxu0 %v1809
      %v1984 = vpop.f32.mrb[0].mxu0
      %v1985 = vadd.f32 0.0, %v1984
      %v1986 = vpop.f32.mrb[0].mxu0
      %1987 = vmatprep.mubr.f32.mxu0 0.0
      %1988 = vmatmul.mubr.f32.gmra.mrb[0].mxu0 %v1812
      %v1989 = vpop.f32.mrb[0].mxu0
      %v1990 = vadd.f32 0.0, %v1989
      %v1991 = vpop.f32.mrb[0].mxu0
      %1992 = vmatprep.mubr.f32.mxu0 0.0
      %1993 = vmatmul.mubr.f32.gmra.mrb[0].mxu0 %v1815
      %v1994 = vpop.f32.mrb[0].mxu0
      %v1995 = vadd.f32 0.0, %v1994
      %v1996 = vpop.f32.mrb[0].mxu0
      %1997 = vmatprep.mubr.f32.mxu0 0.0
      %1998 = vmatmul.mubr.f32.gmra.mrb[0].mxu0 %v1818
      %v1999 = vpop.f32.mrb[0].mxu0
      %v2000 = vadd.f32 0.0, %v1999
      %v2001 = vpop.f32.mrb[0].mxu0
      %2002 = vmatprep.mubr.f32.mxu0 0.0
      %2003 = vmatmul.mubr.f32.gmra.mrb[0].mxu0 %v1821
      %v2004 = vpop.f32.mrb[0].mxu0
      %v2005 = vadd.f32 0.0, %v2004
      %v2006 = vpop.f32.mrb[0].mxu0
      %2007 = vmatprep.mubr.f32.mxu0 0.0
      %2008 = vmatmul.mubr.f32.gmra.mrb[0].mxu0 %v1824
      %v2009 = vpop.f32.mrb[0].mxu0
      %v2010 = vadd.f32 0.0, %v2009
      %v2011 = vpop.f32.mrb[0].mxu0
      %2012 = vmatprep.mubr.f32.mxu0 0.0
      %2013 = vmatmul.mubr.f32.gmra.mrb[0].mxu0 %v1827
      %v2014 = vpop.f32.mrb[0].mxu0
      %v2015 = vadd.f32 0.0, %v2014
      %v2016 = vpop.f32.mrb[0].mxu0
      %2017 = vmatprep.mubr.f32.mxu0 0.0
      %2018 = vmatmul.mubr.f32.gmra.mrb[0].mxu0 %v1830
      %v2019 = vpop.f32.mrb[0].mxu0
      %v2020 = vadd.f32 0.0, %v2019
      %v2021 = vpop.f32.mrb[0].mxu0
      %2022 = vmatprep.mubr.f32.mxu0 0.0
      %2023 = vmatmul.mubr.f32.gmra.mrb[0].mxu0 %v1833
      %v2024 = vpop.f32.mrb[0].mxu0
      %v2025 = vadd.f32 0.0, %v2024
      %v2026 = vpop.f32.mrb[0].mxu0
      %2027 = vmatprep.mubr.f32.mxu0 0.0
      %2028 = vmatmul.mubr.f32.gmra.mrb[0].mxu0 %v1836
      %v2029 = vpop.f32.mrb[0].mxu0
      %v2030 = vadd.f32 0.0, %v2029
      %v2031 = vpop.f32.mrb[0].mxu0
      %2032 = vmatprep.mubr.f32.mxu0 0.0
      %2033 = vmatmul.mubr.f32.gmra.mrb[0].mxu0 %v1839
      %v2034 = vpop.f32.mrb[0].mxu0
      %v2035 = vadd.f32 0.0, %v2034
      %v2036 = vpop.f32.mrb[0].mxu0
      %2037 = vmatprep.mubr.f32.mxu0 0.0
      %2038 = vmatmul.mubr.f32.gmra.mrb[0].mxu0 %v1842
      %v2039 = vpop.f32.mrb[0].mxu0
      %v2040 = vadd.f32 0.0, %v2039
      %v2041 = vpop.f32.mrb[0].mxu0
      %2042 = vmatprep.mubr.f32.mxu0 0.0
      %2043 = vmatmul.mubr.f32.gmra.mrb[0].mxu0 %v1845
      %v2044 = vpop.f32.mrb[0].mxu0
      %v2045 = vadd.f32 0.0, %v2044
      %v2046 = vpop.f32.mrb[0].mxu0
      %2047 = vmatprep.mubr.f32.mxu0 0.0
      %2048 = vmatmul.mubr.f32.gmra.mrb[0].mxu0 %v1848
      %v2049 = vpop.f32.mrb[0].mxu0
      %v2050 = vadd.f32 0.0, %v2049
      %v2051 = vpop.f32.mrb[0].mxu0
      %2052 = vmatprep.mubr.f32.mxu0 0.0
      %2053 = vmatmul.mubr.f32.gmra.mrb[0].mxu0 %v1851
      %v2054 = vpop.f32.mrb[0].mxu0
      %v2055 = vadd.f32 0.0, %v2054
      %v2056 = vpop.f32.mrb[0].mxu0
      %2057 = vmatprep.mubr.f32.mxu0 0.0
      %2058 = vmatmul.mubr.f32.gmra.mrb[0].mxu0 %v1854
      %v2059 = vpop.f32.mrb[0].mxu0
      %v2060 = vadd.f32 0.0, %v2059
      %v2061 = vpop.f32.mrb[0].mxu0
      %2062 = vmatprep.mubr.f32.mxu0 0.0
      %2063 = vmatmul.mubr.f32.gmra.mrb[0].mxu0 %v1857
      %v2064 = vpop.f32.mrb[0].mxu0
      %v2065 = vadd.f32 0.0, %v2064
      %v2066 = vpop.f32.mrb[0].mxu0
      %2067 = vmatprep.mubr.f32.mxu0 0.0
      %2068 = vmatmul.mubr.f32.gmra.mrb[0].mxu0 %v1860
      %v2069 = vpop.f32.mrb[0].mxu0
      %v2070 = vadd.f32 0.0, %v2069
      %v2071 = vpop.f32.mrb[0].mxu0
      %2072 = vmatprep.mubr.f32.mxu0 0.0
      %2073 = vmatmul.mubr.f32.gmra.mrb[0].mxu0 %v1863
      %v2074 = vpop.f32.mrb[0].mxu0
      %v2075 = vadd.f32 0.0, %v2074
      %v2076 = vpop.f32.mrb[0].mxu0
      %2077 = vmatprep.mubr.f32.mxu0 0.0
      %2078 = vmatmul.mubr.f32.gmra.mrb[0].mxu0 %v1866
      %v2079 = vpop.f32.mrb[0].mxu0
      %v2080 = vadd.f32 0.0, %v2079
      %v2081 = vpop.f32.mrb[0].mxu0
      %2082 = vmatprep.mubr.f32.mxu0 0.0
      %2083 = vmatmul.mubr.f32.gmra.mrb[0].mxu0 %v1869
      %v2084 = vpop.f32.mrb[0].mxu0
      %v2085 = vadd.f32 0.0, %v2084
      %v2086 = vpop.f32.mrb[0].mxu0
      %2087 = vmatprep.mubr.f32.mxu0 0.0
      %2088 = vmatmul.mubr.f32.gmra.mrb[0].mxu0 %v1872
      %v2089 = vpop.f32.mrb[0].mxu0
      %v2090 = vadd.f32 0.0, %v2089
      %v2091 = vpop.f32.mrb[0].mxu0
      %2092 = vmatprep.mubr.f32.mxu0 0.0
      %2093 = vmatmul.mubr.f32.gmra.mrb[0].mxu0 %v1875
      %v2094 = vpop.f32.mrb[0].mxu0
      %v2095 = vadd.f32 0.0, %v2094
      %v2096 = vpop.f32.mrb[0].mxu0
      %2097 = vmatprep.mubr.f32.mxu0 0.0
      %2098 = vmatmul.mubr.f32.gmra.mrb[0].mxu0 %v1878
      %v2099 = vpop.f32.mrb[0].mxu0
      %v2100 = vadd.f32 0.0, %v2099
      %v2101 = vpop.f32.mrb[0].mxu0
      %2102 = vmatprep.mubr.f32.mxu0 0.0
      %2103 = vmatmul.mubr.f32.gmra.mrb[0].mxu0 %v1881
      %v2104 = vpop.f32.mrb[0].mxu0
      %v2105 = vadd.f32 0.0, %v2104
      %v2106 = vpop.f32.mrb[0].mxu0
      %2107 = vmatprep.mubr.f32.mxu0 0.0
      %2108 = vmatmul.mubr.f32.gmra.mrb[0].mxu0 %v1884
      %v2109 = vpop.f32.mrb[0].mxu0
      %v2110 = vadd.f32 0.0, %v2109
      %v2111 = vpop.f32.mrb[0].mxu0
      %2112 = vmatprep.mubr.f32.mxu0 0.0
      %2113 = vmatmul.mubr.f32.gmra.mrb[0].mxu0 %v1887
      %v2114 = vpop.f32.mrb[0].mxu0
      %v2115 = vadd.f32 0.0, %v2114
      %v2116 = vpop.f32.mrb[0].mxu0
      %2117 = vdwg.mxu0
      %v2118 = vmax.f32 %v1960, 0.0
      %v2119 = vmax.f32 %v1965, 0.0
      %v2120 = vmax.f32 %v1970, 0.0
      %v2121 = vmax.f32 %v1975, 0.0
      %v2122 = vmax.f32 %v1980, 0.0
      %v2123 = vmax.f32 %v1985, 0.0
      %v2124 = vmax.f32 %v1990, 0.0
      %v2125 = vmax.f32 %v1995, 0.0
      %v2126 = vmax.f32 %v2000, 0.0
      %v2127 = vmax.f32 %v2005, 0.0
      %v2128 = vmax.f32 %v2010, 0.0
      %v2129 = vmax.f32 %v2015, 0.0
      %v2130 = vmax.f32 %v2020, 0.0
      %v2131 = vmax.f32 %v2025, 0.0
      %v2132 = vmax.f32 %v2030, 0.0
      %v2133 = vmax.f32 %v2035, 0.0
      %v2134 = vmax.f32 %v2040, 0.0
      %v2135 = vmax.f32 %v2045, 0.0
      %v2136 = vmax.f32 %v2050, 0.0
      %v2137 = vmax.f32 %v2055, 0.0
      %v2138 = vmax.f32 %v2060, 0.0
      %v2139 = vmax.f32 %v2065, 0.0
      %v2140 = vmax.f32 %v2070, 0.0
      %v2141 = vmax.f32 %v2075, 0.0
      %v2142 = vmax.f32 %v2080, 0.0
      %v2143 = vmax.f32 %v2085, 0.0
      %v2144 = vmax.f32 %v2090, 0.0
      %v2145 = vmax.f32 %v2095, 0.0
      %v2146 = vmax.f32 %v2100, 0.0
      %v2147 = vmax.f32 %v2105, 0.0
      %v2148 = vmax.f32 %v2110, 0.0
      %v2149 = vmax.f32 %v2115, 0.0
      %vm2150 = vcmask 64512
      %2151 = vst.msk [vmem:[%s143] sm:$0xff] %vm2150, %v2118
      %2152 = vst.msk [vmem:[%s143 + $0x8] sm:$0xff] %vm2150, %v2119
      %2153 = vst.msk [vmem:[%s143 + $0x10] sm:$0xff] %vm2150, %v2120
      %2154 = vst.msk [vmem:[%s143 + $0x18] sm:$0xff] %vm2150, %v2121
      %2155 = vst.msk [vmem:[%s143 + $0x20] sm:$0xff] %vm2150, %v2122
      %2156 = vst.msk [vmem:[%s143 + $0x28] sm:$0xff] %vm2150, %v2123
      %2157 = vst.msk [vmem:[%s143 + $0x30] sm:$0xff] %vm2150, %v2124
      %2158 = vst.msk [vmem:[%s143 + $0x38] sm:$0xff] %vm2150, %v2125
      %2159 = vst.msk [vmem:[%s143 + $0x40] sm:$0xff] %vm2150, %v2126
      %2160 = vst.msk [vmem:[%s143 + $0x48] sm:$0xff] %vm2150, %v2127
      %2161 = vst.msk [vmem:[%s143 + $0x50] sm:$0xff] %vm2150, %v2128
      %2162 = vst.msk [vmem:[%s143 + $0x58] sm:$0xff] %vm2150, %v2129
      %2163 = vst.msk [vmem:[%s143 + $0x60] sm:$0xff] %vm2150, %v2130
      %2164 = vst.msk [vmem:[%s143 + $0x68] sm:$0xff] %vm2150, %v2131
      %2165 = vst.msk [vmem:[%s143 + $0x70] sm:$0xff] %vm2150, %v2132
      %2166 = vst.msk [vmem:[%s143 + $0x78] sm:$0xff] %vm2150, %v2133
      %2167 = vst.msk [vmem:[%s143 + $0x80] sm:$0xff] %vm2150, %v2134
      %2168 = vst.msk [vmem:[%s143 + $0x88] sm:$0xff] %vm2150, %v2135
      %2169 = vst.msk [vmem:[%s143 + $0x90] sm:$0xff] %vm2150, %v2136
      %2170 = vst.msk [vmem:[%s143 + $0x98] sm:$0xff] %vm2150, %v2137
      %2171 = vst.msk [vmem:[%s143 + $0xa0] sm:$0xff] %vm2150, %v2138
      %2172 = vst.msk [vmem:[%s143 + $0xa8] sm:$0xff] %vm2150, %v2139
      %2173 = vst.msk [vmem:[%s143 + $0xb0] sm:$0xff] %vm2150, %v2140
      %2174 = vst.msk [vmem:[%s143 + $0xb8] sm:$0xff] %vm2150, %v2141
      %2175 = vst.msk [vmem:[%s143 + $0xc0] sm:$0xff] %vm2150, %v2142
      %2176 = vst.msk [vmem:[%s143 + $0xc8] sm:$0xff] %vm2150, %v2143
      %2177 = vst.msk [vmem:[%s143 + $0xd0] sm:$0xff] %vm2150, %v2144
      %2178 = vst.msk [vmem:[%s143 + $0xd8] sm:$0xff] %vm2150, %v2145
      %2179 = vst.msk [vmem:[%s143 + $0xe0] sm:$0xff] %vm2150, %v2146
      %2180 = vst.msk [vmem:[%s143 + $0xe8] sm:$0xff] %vm2150, %v2147
      %2181 = vst.msk [vmem:[%s143 + $0xf0] sm:$0xff] %vm2150, %v2148
      %2182 = vst.msk [vmem:[%s143 + $0xf8] sm:$0xff] %vm2150, %v2149
      %p2183 = scmp.lt.s32.totalorder %s13, 1
      %s2184 = scalar_select %p2183, %s13, 1
      %s2185 = smul.addr %s2184, 32
      %s2186 = smul.addr %s2185, 8
      %s2187 = scalar_lea.vmem %s2, %s2186
      // Predicated region
      $region29: #{conv_relu.1} parent=27 // pred_check
        %p2188 = pneg %p78
      $region30: #{conv_relu.1} parent=27 // pred_check_branch
        %2190 = sbr.rel (%p2188) target = $region32
      $region31: #{conv_relu.1} parent=27 // pred_region
        _
      $region32: #{conv_relu.1} parent=27 // pred_fallthru
        _
    $region28: #{conv_relu.1} parent=5 // pred_fallthru
      _
    %p2191 = scmp.le.s32.totalorder 2, %s8
    // Predicated region
    $region33: #{conv_relu.1} parent=5 // pred_check
      %p2192 = pneg %p2191
    $region34: #{conv_relu.1} parent=5 // pred_check_branch
      %2194 = sbr.rel (%p2192) target = $region36
    $region35: #{conv_relu.1} parent=5 // pred_region
      %s2195 = ssub.s32 %s8, 2
      // Predicated region
      $region37: #{conv_relu.1} parent=35 // pred_check
        %p2196 = pneg %p84
      $region38: #{conv_relu.1} parent=35 // pred_check_branch
        %2198 = sbr.rel (%p2196) target = $region40
      $region39: #{conv_relu.1} parent=35 // pred_region
        %p2199 = scmp.lt.s32.totalorder %s14, 1
        %s2200 = scalar_select %p2199, %s14, 1
        %s2201 = smul.addr %s2200, 32
        %s2202 = smul.addr %s2201, 8
        %s2203 = scalar_lea.vmem %s2, %s2202
      $region40: #{conv_relu.1} parent=35 // pred_fallthru
        _
    $region36: #{conv_relu.1} parent=5 // pred_fallthru
      _
  $region6: #{conv_relu.1} parent=0 // loop_footer
    %s12 = sadd.s32 1, %s8
  $region7: #{conv_relu.1} parent=0 // loop_footer_branch
    %7 = sbr.rel target = $region3
  $region8: #{conv_relu.1} parent=0 // loop_exit
    _

</llo_original>
